<compile_context>
chip_gen: v6e
topology: v6e:2x2x1
jax: 0.10.0
libtpu: 0.0.40
codegen_flags: <defaults>
</compile_context>

<pallas_src>
import jax
import jax.numpy as jnp
from jax import lax
from jax.experimental import pallas as pl
from jax.experimental.pallas import tpu as pltpu  # noqa: F401

# Small, deterministic synthetic config
B, T = 2, 8            # batch, sequence length
V, E, H = 50, 16, 32   # vocab, embedding dim, hidden dim
N_DOMAIN, N_INTENT, N_SLOT = 5, 7, 9
P = 128                # lane-dense padded logits width (sliced back in wrapper)
TB = T * B
OUT_ROWS = TB + 2 * B  # slot rows (time-major) + domain rows + intent rows

assert B & (B - 1) == 0, "batch-interleave mask uses bitwise ops; B must be a power of two"
LOG2_B = (B - 1).bit_length()
NEG = -1e9


def _softmax_lanes(scores):
    s = scores - jnp.max(scores, axis=-1, keepdims=True)
    p = jnp.exp(s)
    inv = pl.reciprocal(jnp.sum(p, axis=-1, keepdims=True), approx=True)  # EUP slot
    return p * inv


def _dot(a, b):
    return jnp.dot(a, b, preferred_element_type=jnp.float32)


# ---------------------------------------------------------------------------
# One fused kernel: embedding + RNN encoder + domain / intent / slot heads.
# ---------------------------------------------------------------------------
def _seq2seq_kernel(ilens_ref, embt_ref, wm_ref, wo_ref, bo_ref, out_ref):
    f32 = jnp.float32

    ints = ilens_ref[...]                        # (TB, 2) int32, time-major rows t*B+b
    ids = ints[:, 0:1]                           # token ids
    lens_tm = ints[:, 1:2]                       # lens[b] replicated per time-major row

    # ---- embedding gather as one-hot matmul; W_ih and b_h pre-folded --------
    onehot = (ids == lax.broadcasted_iota(jnp.int32, (TB, V), 1)).astype(f32)
    x_proj = _dot(onehot, embt_ref[...])         # (TB, H) == x @ W_ih + b_h

    # packed (H,H) weights: sublane-aligned static row slices of the ref
    w_hh     = wm_ref[0 * H:1 * H, :]
    w_att_d  = wm_ref[1 * H:2 * H, :]
    w_cond_i = wm_ref[2 * H:3 * H, :]
    w_att_i  = wm_ref[3 * H:4 * H, :]
    w_cond_s = wm_ref[4 * H:5 * H, :]
    w_att_s  = wm_ref[5 * H:6 * H, :]

    # ---- RNN recurrence: fully unrolled, states live in vregs (no scratch) --
    hs = []
    h = jnp.tanh(x_proj[0:B, :])                 # step 0: h_prev == 0
    hs.append(h)
    for t in range(1, T):                        # static unroll; only h @ W_hh serialized
        h = jnp.tanh(x_proj[t * B:(t + 1) * B, :] + _dot(h, w_hh))
        hs.append(h)
    outs = jnp.concatenate(hs, axis=0)           # (TB, H) time-major encoder outputs
    last = h                                     # == outputs[:, -1, :]

    # ---- additive masks: same-batch interleave + sequence length ------------
    lens_b = lens_tm[0:B, :]                     # (B, 1) == lLensSeqin
    col_q = lax.broadcasted_iota(jnp.int32, (B, TB), 1)
    row_q = lax.broadcasted_iota(jnp.int32, (B, TB), 0)
    mask_qi = jnp.where(((col_q & (B - 1)) == row_q) & ((col_q >> LOG2_B) < lens_b),
                        f32(0.0), f32(NEG))                              # (B, TB)

    col_s = lax.broadcasted_iota(jnp.int32, (TB, TB), 1)
    row_s = lax.broadcasted_iota(jnp.int32, (TB, TB), 0)
    mask_s = jnp.where(((col_s & (B - 1)) == (row_s & (B - 1)))
                       & ((col_s >> LOG2_B) < lens_tm),
                       f32(0.0), f32(NEG))                               # (TB, TB)

    # ---- domain head (no conditioning vector) --------------------------------
    q_d = last                                                           # (B, H)
    a_d = _softmax_lanes(_dot(_dot(q_d, w_att_d), outs.T) + mask_qi)     # (B, TB)
    ctx_d = _dot(a_d, outs)                                              # (B, H)
    dom = _dot(jnp.concatenate([q_d, ctx_d], axis=1), wo_ref[0:2 * H, :]) + bo_ref[0:1, :]

    # ---- intent head (conditioned on domain context) -------------------------
    q_i = last + _dot(ctx_d, w_cond_i)
    a_i = _softmax_lanes(_dot(_dot(q_i, w_att_i), outs.T) + mask_qi)
    ctx_i = _dot(a_i, outs)
    itt = _dot(jnp.concatenate([q_i, ctx_i], axis=1), wo_ref[2 * H:4 * H, :]) + bo_ref[1:2, :]

    # ---- slot head (per-position masked self-attn, conditioned on intent) ----
    cond = _dot(ctx_i, w_cond_s)                                         # (B, H)
    q_s = outs + jnp.concatenate([cond] * T, axis=0)                     # (TB, H)
    a_s = _softmax_lanes(_dot(_dot(q_s, w_att_s), outs.T) + mask_s)      # (TB, TB)
    ctx_s = _dot(a_s, outs)                                              # (TB, H)
    slot = _dot(jnp.concatenate([outs, ctx_s], axis=1), wo_ref[4 * H:6 * H, :]) + bo_ref[2:3, :]

    # ---- single lane-dense packed output (one DMA) ---------------------------
    out_ref[0:TB, :] = slot                      # slot logits, time-major rows t*B+b
    out_ref[TB:TB + B, :] = dom                  # domain logits
    out_ref[TB + B:TB + 2 * B, :] = itt          # intent logits


# ---------------------------------------------------------------------------
# Full forward: one pallas_call (everything resident in VMEM), tiny XLA glue.
# ---------------------------------------------------------------------------
def seq2seq_forward(seqIn, lLensSeqin, params):
    # Token ids flattened time-major so the unrolled recurrence takes static
    # contiguous row slices; lengths replicated to the same layout for the
    # in-kernel masks.  Both packed into one int32 input (one DMA).
    ids_tm = jnp.transpose(seqIn, (1, 0)).reshape(TB, 1).astype(jnp.int32)
    lens_tm = jnp.tile(lLensSeqin.reshape(1, B), (T, 1)).reshape(TB, 1).astype(jnp.int32)
    ilens = jnp.concatenate([ids_tm, lens_tm], axis=1)                   # (TB, 2)

    out = pl.pallas_call(
        _seq2seq_kernel,
        out_shape=jax.ShapeDtypeStruct((OUT_ROWS, P), jnp.float32),
    )(ilens, params['emb_table'], params['w_mats'], params['w_out'], params['b_out'])

    # Unpack + slice the lane-dense padded logits back to logical widths.
    slots = out[0:TB, :].reshape(T, B, P).transpose(1, 0, 2)[:, :, :N_SLOT]
    domain = out[TB:TB + B, :N_DOMAIN]
    intent = out[TB + B:TB + 2 * B, :N_INTENT]
    return domain, intent, slots


def init_params(key):
    keys = jax.random.split(key, 15)
    scale = 0.1

    def rnd(k, shape):
        return jax.random.normal(k, shape, jnp.float32) * scale

    def pad_out(w):
        # zero-pad output-projection weights to P lanes -> lane-dense stores
        return jnp.pad(w, ((0, 0), (0, P - w.shape[1])))

    emb = rnd(keys[0], (V, E))
    w_ih = rnd(keys[1], (E, H))
    w_hh = rnd(keys[2], (H, H))
    b_h = jnp.zeros((1, H), jnp.float32)
    # keys[3] was the (unused) domain w_cond in the reference composition.
    w_att_d = rnd(keys[4], (H, H))
    w_oq_d, w_oc_d = rnd(keys[5], (H, N_DOMAIN)), rnd(keys[6], (H, N_DOMAIN))
    w_cond_i, w_att_i = rnd(keys[7], (H, H)), rnd(keys[8], (H, H))
    w_oq_i, w_oc_i = rnd(keys[9], (H, N_INTENT)), rnd(keys[10], (H, N_INTENT))
    w_cond_s, w_att_s = rnd(keys[11], (H, H)), rnd(keys[12], (H, H))
    w_oo_s, w_oc_s = rnd(keys[13], (H, N_SLOT)), rnd(keys[14], (H, N_SLOT))

    # One-time init-side folds / packing (NOT per-call wrapper compute):
    emb_table = emb @ w_ih + b_h                                   # (V, H)
    w_mats = jnp.concatenate(                                      # (6H, H)
        [w_hh, w_att_d, w_cond_i, w_att_i, w_cond_s, w_att_s], axis=0)

    def head_out(wq, wc):                                          # (2H, P) merged [q;ctx] proj
        return jnp.concatenate([pad_out(wq), pad_out(wc)], axis=0)

    w_out = jnp.concatenate([head_out(w_oq_d, w_oc_d),             # (6H, P)
                             head_out(w_oq_i, w_oc_i),
                             head_out(w_oo_s, w_oc_s)], axis=0)
    b_out = jnp.zeros((3, P), jnp.float32)                         # domain / intent / slot biases

    return {'emb_table': emb_table, 'w_mats': w_mats, 'w_out': w_out, 'b_out': b_out}


if __name__ == "__main__":
    key = jax.random.PRNGKey(0)
    pkey, dkey = jax.random.split(key)
    params = init_params(pkey)
    seqIn = jax.random.randint(dkey, (B, T), 0, V, dtype=jnp.int32)
    lLensSeqin = jnp.array([T, 5], dtype=jnp.int32)

    fwd = jax.jit(seq2seq_forward)
    domain, intent, slots = fwd(seqIn, lLensSeqin, params)
    jax.block_until_ready((domain, intent, slots))

    assert domain.shape == (B, N_DOMAIN)
    assert intent.shape == (B, N_INTENT)
    assert slots.shape == (B, T, N_SLOT)
    assert bool(jnp.all(jnp.isfinite(domain)))
    assert bool(jnp.all(jnp.isfinite(intent)))
    assert bool(jnp.all(jnp.isfinite(slots)))
    print("KERNEL_OK")
</pallas_src>

<mosaic_0001>
module attributes {stable_mosaic.version = 11 : i64} {
  func.func @_seq2seq_kernel(%arg0: memref<16x2xi32, #tpu.memory_space<vmem>>, %arg1: memref<50x32xf32, #tpu.memory_space<vmem>>, %arg2: memref<192x32xf32, #tpu.memory_space<vmem>>, %arg3: memref<192x128xf32, #tpu.memory_space<vmem>>, %arg4: memref<3x128xf32, #tpu.memory_space<vmem>>, %arg5: memref<20x128xf32, #tpu.memory_space<vmem>>) attributes {dimension_semantics = [], scalar_prefetch = 0 : i64, scratch_operands = 0 : i64, tpu.core_type = #tpu.core_type<tc>} {
    %c0 = arith.constant 0 : index
    %c0_0 = arith.constant 0 : index
    %0 = vector.load %arg0[%c0, %c0_0] : memref<16x2xi32, #tpu.memory_space<vmem>>, vector<16x2xi32>
    %1 = vector.extract_strided_slice %0 {offsets = [0, 0], sizes = [16, 1], strides = [1, 1]} : vector<16x2xi32> to vector<16x1xi32>
    %2 = vector.extract_strided_slice %0 {offsets = [0, 1], sizes = [16, 1], strides = [1, 1]} : vector<16x2xi32> to vector<16x1xi32>
    %3 = tpu.iota {dimensions = array<i32: 1>} : vector<16x50xi32>
    %4 = vector.broadcast %1 : vector<16x1xi32> to vector<16x50xi32>
    %5 = arith.cmpi eq, %4, %3 : vector<16x50xi32>
    %6 = arith.extui %5 : vector<16x50xi1> to vector<16x50xi32>
    %7 = arith.sitofp %6 : vector<16x50xi32> to vector<16x50xf32>
    %c0_1 = arith.constant 0 : index
    %c0_2 = arith.constant 0 : index
    %8 = vector.load %arg1[%c0_1, %c0_2] : memref<50x32xf32, #tpu.memory_space<vmem>>, vector<50x32xf32>
    %cst = arith.constant dense<0.000000e+00> : vector<16x32xf32>
    %9 = tpu.matmul %7, %8, %cst {dimension_numbers = #tpu.dot_dimension_numbers<[1], [0], [0], [1], [0, 0, 1, 1], [], []>} : vector<16x50xf32>, vector<50x32xf32>, vector<16x32xf32> -> vector<16x32xf32>
    %c0_3 = arith.constant 0 : index
    %c0_4 = arith.constant 0 : index
    %10 = vector.load %arg2[%c0_3, %c0_4] : memref<192x32xf32, #tpu.memory_space<vmem>>, vector<32x32xf32>
    %c32 = arith.constant 32 : index
    %c0_5 = arith.constant 0 : index
    %11 = vector.load %arg2[%c32, %c0_5] : memref<192x32xf32, #tpu.memory_space<vmem>>, vector<32x32xf32>
    %c64 = arith.constant 64 : index
    %c0_6 = arith.constant 0 : index
    %12 = vector.load %arg2[%c64, %c0_6] : memref<192x32xf32, #tpu.memory_space<vmem>>, vector<32x32xf32>
    %c96 = arith.constant 96 : index
    %c0_7 = arith.constant 0 : index
    %13 = vector.load %arg2[%c96, %c0_7] : memref<192x32xf32, #tpu.memory_space<vmem>>, vector<32x32xf32>
    %c128 = arith.constant 128 : index
    %c0_8 = arith.constant 0 : index
    %14 = vector.load %arg2[%c128, %c0_8] : memref<192x32xf32, #tpu.memory_space<vmem>>, vector<32x32xf32>
    %c160 = arith.constant 160 : index
    %c0_9 = arith.constant 0 : index
    %15 = vector.load %arg2[%c160, %c0_9] : memref<192x32xf32, #tpu.memory_space<vmem>>, vector<32x32xf32>
    %16 = vector.extract_strided_slice %9 {offsets = [0, 0], sizes = [2, 32], strides = [1, 1]} : vector<16x32xf32> to vector<2x32xf32>
    %17 = math.tanh %16 : vector<2x32xf32>
    %18 = vector.extract_strided_slice %9 {offsets = [2, 0], sizes = [2, 32], strides = [1, 1]} : vector<16x32xf32> to vector<2x32xf32>
    %cst_10 = arith.constant dense<0.000000e+00> : vector<2x32xf32>
    %19 = tpu.matmul %17, %10, %cst_10 {dimension_numbers = #tpu.dot_dimension_numbers<[1], [0], [0], [1], [0, 0, 1, 1], [], []>} : vector<2x32xf32>, vector<32x32xf32>, vector<2x32xf32> -> vector<2x32xf32>
    %20 = arith.addf %18, %19 : vector<2x32xf32>
    %21 = math.tanh %20 : vector<2x32xf32>
    %22 = vector.extract_strided_slice %9 {offsets = [4, 0], sizes = [2, 32], strides = [1, 1]} : vector<16x32xf32> to vector<2x32xf32>
    %cst_11 = arith.constant dense<0.000000e+00> : vector<2x32xf32>
    %23 = tpu.matmul %21, %10, %cst_11 {dimension_numbers = #tpu.dot_dimension_numbers<[1], [0], [0], [1], [0, 0, 1, 1], [], []>} : vector<2x32xf32>, vector<32x32xf32>, vector<2x32xf32> -> vector<2x32xf32>
    %24 = arith.addf %22, %23 : vector<2x32xf32>
    %25 = math.tanh %24 : vector<2x32xf32>
    %26 = vector.extract_strided_slice %9 {offsets = [6, 0], sizes = [2, 32], strides = [1, 1]} : vector<16x32xf32> to vector<2x32xf32>
    %cst_12 = arith.constant dense<0.000000e+00> : vector<2x32xf32>
    %27 = tpu.matmul %25, %10, %cst_12 {dimension_numbers = #tpu.dot_dimension_numbers<[1], [0], [0], [1], [0, 0, 1, 1], [], []>} : vector<2x32xf32>, vector<32x32xf32>, vector<2x32xf32> -> vector<2x32xf32>
    %28 = arith.addf %26, %27 : vector<2x32xf32>
    %29 = math.tanh %28 : vector<2x32xf32>
    %30 = vector.extract_strided_slice %9 {offsets = [8, 0], sizes = [2, 32], strides = [1, 1]} : vector<16x32xf32> to vector<2x32xf32>
    %cst_13 = arith.constant dense<0.000000e+00> : vector<2x32xf32>
    %31 = tpu.matmul %29, %10, %cst_13 {dimension_numbers = #tpu.dot_dimension_numbers<[1], [0], [0], [1], [0, 0, 1, 1], [], []>} : vector<2x32xf32>, vector<32x32xf32>, vector<2x32xf32> -> vector<2x32xf32>
    %32 = arith.addf %30, %31 : vector<2x32xf32>
    %33 = math.tanh %32 : vector<2x32xf32>
    %34 = vector.extract_strided_slice %9 {offsets = [10, 0], sizes = [2, 32], strides = [1, 1]} : vector<16x32xf32> to vector<2x32xf32>
    %cst_14 = arith.constant dense<0.000000e+00> : vector<2x32xf32>
    %35 = tpu.matmul %33, %10, %cst_14 {dimension_numbers = #tpu.dot_dimension_numbers<[1], [0], [0], [1], [0, 0, 1, 1], [], []>} : vector<2x32xf32>, vector<32x32xf32>, vector<2x32xf32> -> vector<2x32xf32>
    %36 = arith.addf %34, %35 : vector<2x32xf32>
    %37 = math.tanh %36 : vector<2x32xf32>
    %38 = vector.extract_strided_slice %9 {offsets = [12, 0], sizes = [2, 32], strides = [1, 1]} : vector<16x32xf32> to vector<2x32xf32>
    %cst_15 = arith.constant dense<0.000000e+00> : vector<2x32xf32>
    %39 = tpu.matmul %37, %10, %cst_15 {dimension_numbers = #tpu.dot_dimension_numbers<[1], [0], [0], [1], [0, 0, 1, 1], [], []>} : vector<2x32xf32>, vector<32x32xf32>, vector<2x32xf32> -> vector<2x32xf32>
    %40 = arith.addf %38, %39 : vector<2x32xf32>
    %41 = math.tanh %40 : vector<2x32xf32>
    %42 = vector.extract_strided_slice %9 {offsets = [14, 0], sizes = [2, 32], strides = [1, 1]} : vector<16x32xf32> to vector<2x32xf32>
    %cst_16 = arith.constant dense<0.000000e+00> : vector<2x32xf32>
    %43 = tpu.matmul %41, %10, %cst_16 {dimension_numbers = #tpu.dot_dimension_numbers<[1], [0], [0], [1], [0, 0, 1, 1], [], []>} : vector<2x32xf32>, vector<32x32xf32>, vector<2x32xf32> -> vector<2x32xf32>
    %44 = arith.addf %42, %43 : vector<2x32xf32>
    %45 = math.tanh %44 : vector<2x32xf32>
    %46 = tpu.concatenate %17, %21, %25, %29, %33, %37, %41, %45 in 0 : vector<2x32xf32>, vector<2x32xf32>, vector<2x32xf32>, vector<2x32xf32>, vector<2x32xf32>, vector<2x32xf32>, vector<2x32xf32>, vector<2x32xf32> -> vector<16x32xf32>
    %47 = vector.extract_strided_slice %2 {offsets = [0, 0], sizes = [2, 1], strides = [1, 1]} : vector<16x1xi32> to vector<2x1xi32>
    %48 = tpu.iota {dimensions = array<i32: 1>} : vector<2x16xi32>
    %49 = tpu.iota {dimensions = array<i32: 0>} : vector<2x16xi32>
    %c1_i32 = arith.constant 1 : i32
    %50 = vector.broadcast %c1_i32 : i32 to vector<2x16xi32>
    %51 = arith.andi %48, %50 : vector<2x16xi32>
    %52 = arith.cmpi eq, %51, %49 : vector<2x16xi32>
    %c1_i32_17 = arith.constant 1 : i32
    %53 = vector.broadcast %c1_i32_17 : i32 to vector<2x16xi32>
    %54 = arith.shrsi %48, %53 : vector<2x16xi32>
    %55 = vector.broadcast %47 : vector<2x1xi32> to vector<2x16xi32>
    %56 = arith.cmpi slt, %54, %55 : vector<2x16xi32>
    %57 = arith.andi %52, %56 : vector<2x16xi1>
    %cst_18 = arith.constant 0.000000e+00 : f32
    %cst_19 = arith.constant -1.000000e+09 : f32
    %58 = vector.broadcast %cst_18 : f32 to vector<2x16xf32>
    %59 = vector.broadcast %cst_19 : f32 to vector<2x16xf32>
    %60 = arith.select %57, %58, %59 : vector<2x16xi1>, vector<2x16xf32>
    %61 = tpu.iota {dimensions = array<i32: 1>} : vector<16x16xi32>
    %62 = tpu.iota {dimensions = array<i32: 0>} : vector<16x16xi32>
    %c1_i32_20 = arith.constant 1 : i32
    %63 = vector.broadcast %c1_i32_20 : i32 to vector<16x16xi32>
    %64 = arith.andi %61, %63 : vector<16x16xi32>
    %c1_i32_21 = arith.constant 1 : i32
    %65 = vector.broadcast %c1_i32_21 : i32 to vector<16x16xi32>
    %66 = arith.andi %62, %65 : vector<16x16xi32>
    %67 = arith.cmpi eq, %64, %66 : vector<16x16xi32>
    %c1_i32_22 = arith.constant 1 : i32
    %68 = vector.broadcast %c1_i32_22 : i32 to vector<16x16xi32>
    %69 = arith.shrsi %61, %68 : vector<16x16xi32>
    %70 = vector.broadcast %2 : vector<16x1xi32> to vector<16x16xi32>
    %71 = arith.cmpi slt, %69, %70 : vector<16x16xi32>
    %72 = arith.andi %67, %71 : vector<16x16xi1>
    %cst_23 = arith.constant 0.000000e+00 : f32
    %cst_24 = arith.constant -1.000000e+09 : f32
    %73 = vector.broadcast %cst_23 : f32 to vector<16x16xf32>
    %74 = vector.broadcast %cst_24 : f32 to vector<16x16xf32>
    %75 = arith.select %72, %73, %74 : vector<16x16xi1>, vector<16x16xf32>
    %cst_25 = arith.constant dense<0.000000e+00> : vector<2x32xf32>
    %76 = tpu.matmul %45, %11, %cst_25 {dimension_numbers = #tpu.dot_dimension_numbers<[1], [0], [0], [1], [0, 0, 1, 1], [], []>} : vector<2x32xf32>, vector<32x32xf32>, vector<2x32xf32> -> vector<2x32xf32>
    %77 = tpu.transpose %46, [1, 0] : vector<16x32xf32> -> vector<32x16xf32>
    %cst_26 = arith.constant dense<0.000000e+00> : vector<2x16xf32>
    %78 = tpu.matmul %76, %77, %cst_26 {dimension_numbers = #tpu.dot_dimension_numbers<[1], [0], [0], [1], [0, 0, 1, 1], [], []>} : vector<2x32xf32>, vector<32x16xf32>, vector<2x16xf32> -> vector<2x16xf32>
    %79 = arith.addf %78, %60 : vector<2x16xf32>
    %cst_27 = arith.constant dense<0xFF800000> : vector<2xf32>
    %80 = vector.multi_reduction <maximumf>, %79, %cst_27 [1] : vector<2x16xf32> to vector<2xf32>
    %81 = vector.shape_cast %80 : vector<2xf32> to vector<2x1xf32>
    %82 = vector.broadcast %81 : vector<2x1xf32> to vector<2x16xf32>
    %83 = arith.subf %79, %82 : vector<2x16xf32>
    %84 = math.exp %83 : vector<2x16xf32>
    %cst_28 = arith.constant dense<0.000000e+00> : vector<2xf32>
    %85 = vector.multi_reduction <add>, %84, %cst_28 [1] : vector<2x16xf32> to vector<2xf32>
    %86 = vector.shape_cast %85 : vector<2xf32> to vector<2x1xf32>
    %87 = tpu.reciprocal %86 {approx = true} : vector<2x1xf32> -> vector<2x1xf32>
    %88 = vector.broadcast %87 : vector<2x1xf32> to vector<2x16xf32>
    %89 = arith.mulf %84, %88 : vector<2x16xf32>
    %cst_29 = arith.constant dense<0.000000e+00> : vector<2x32xf32>
    %90 = tpu.matmul %89, %46, %cst_29 {dimension_numbers = #tpu.dot_dimension_numbers<[1], [0], [0], [1], [0, 0, 1, 1], [], []>} : vector<2x16xf32>, vector<16x32xf32>, vector<2x32xf32> -> vector<2x32xf32>
    %91 = tpu.concatenate %45, %90 in 1 : vector<2x32xf32>, vector<2x32xf32> -> vector<2x64xf32>
    %c0_30 = arith.constant 0 : index
    %c0_31 = arith.constant 0 : index
    %92 = vector.load %arg3[%c0_30, %c0_31] : memref<192x128xf32, #tpu.memory_space<vmem>>, vector<64x128xf32>
    %cst_32 = arith.constant dense<0.000000e+00> : vector<2x128xf32>
    %93 = tpu.matmul %91, %92, %cst_32 {dimension_numbers = #tpu.dot_dimension_numbers<[1], [0], [0], [1], [0, 0, 1, 1], [], []>} : vector<2x64xf32>, vector<64x128xf32>, vector<2x128xf32> -> vector<2x128xf32>
    %c0_33 = arith.constant 0 : index
    %c0_34 = arith.constant 0 : index
    %94 = vector.load %arg4[%c0_33, %c0_34] : memref<3x128xf32, #tpu.memory_space<vmem>>, vector<1x128xf32>
    %95 = vector.broadcast %94 : vector<1x128xf32> to vector<2x128xf32>
    %96 = arith.addf %93, %95 : vector<2x128xf32>
    %cst_35 = arith.constant dense<0.000000e+00> : vector<2x32xf32>
    %97 = tpu.matmul %90, %12, %cst_35 {dimension_numbers = #tpu.dot_dimension_numbers<[1], [0], [0], [1], [0, 0, 1, 1], [], []>} : vector<2x32xf32>, vector<32x32xf32>, vector<2x32xf32> -> vector<2x32xf32>
    %98 = arith.addf %45, %97 : vector<2x32xf32>
    %cst_36 = arith.constant dense<0.000000e+00> : vector<2x32xf32>
    %99 = tpu.matmul %98, %13, %cst_36 {dimension_numbers = #tpu.dot_dimension_numbers<[1], [0], [0], [1], [0, 0, 1, 1], [], []>} : vector<2x32xf32>, vector<32x32xf32>, vector<2x32xf32> -> vector<2x32xf32>
    %100 = tpu.transpose %46, [1, 0] : vector<16x32xf32> -> vector<32x16xf32>
    %cst_37 = arith.constant dense<0.000000e+00> : vector<2x16xf32>
    %101 = tpu.matmul %99, %100, %cst_37 {dimension_numbers = #tpu.dot_dimension_numbers<[1], [0], [0], [1], [0, 0, 1, 1], [], []>} : vector<2x32xf32>, vector<32x16xf32>, vector<2x16xf32> -> vector<2x16xf32>
    %102 = arith.addf %101, %60 : vector<2x16xf32>
    %cst_38 = arith.constant dense<0xFF800000> : vector<2xf32>
    %103 = vector.multi_reduction <maximumf>, %102, %cst_38 [1] : vector<2x16xf32> to vector<2xf32>
    %104 = vector.shape_cast %103 : vector<2xf32> to vector<2x1xf32>
    %105 = vector.broadcast %104 : vector<2x1xf32> to vector<2x16xf32>
    %106 = arith.subf %102, %105 : vector<2x16xf32>
    %107 = math.exp %106 : vector<2x16xf32>
    %cst_39 = arith.constant dense<0.000000e+00> : vector<2xf32>
    %108 = vector.multi_reduction <add>, %107, %cst_39 [1] : vector<2x16xf32> to vector<2xf32>
    %109 = vector.shape_cast %108 : vector<2xf32> to vector<2x1xf32>
    %110 = tpu.reciprocal %109 {approx = true} : vector<2x1xf32> -> vector<2x1xf32>
    %111 = vector.broadcast %110 : vector<2x1xf32> to vector<2x16xf32>
    %112 = arith.mulf %107, %111 : vector<2x16xf32>
    %cst_40 = arith.constant dense<0.000000e+00> : vector<2x32xf32>
    %113 = tpu.matmul %112, %46, %cst_40 {dimension_numbers = #tpu.dot_dimension_numbers<[1], [0], [0], [1], [0, 0, 1, 1], [], []>} : vector<2x16xf32>, vector<16x32xf32>, vector<2x32xf32> -> vector<2x32xf32>
    %114 = tpu.concatenate %98, %113 in 1 : vector<2x32xf32>, vector<2x32xf32> -> vector<2x64xf32>
    %c64_41 = arith.constant 64 : index
    %c0_42 = arith.constant 0 : index
    %115 = vector.load %arg3[%c64_41, %c0_42] : memref<192x128xf32, #tpu.memory_space<vmem>>, vector<64x128xf32>
    %cst_43 = arith.constant dense<0.000000e+00> : vector<2x128xf32>
    %116 = tpu.matmul %114, %115, %cst_43 {dimension_numbers = #tpu.dot_dimension_numbers<[1], [0], [0], [1], [0, 0, 1, 1], [], []>} : vector<2x64xf32>, vector<64x128xf32>, vector<2x128xf32> -> vector<2x128xf32>
    %c1 = arith.constant 1 : index
    %c0_44 = arith.constant 0 : index
    %117 = vector.load %arg4[%c1, %c0_44] : memref<3x128xf32, #tpu.memory_space<vmem>>, vector<1x128xf32>
    %118 = vector.broadcast %117 : vector<1x128xf32> to vector<2x128xf32>
    %119 = arith.addf %116, %118 : vector<2x128xf32>
    %cst_45 = arith.constant dense<0.000000e+00> : vector<2x32xf32>
    %120 = tpu.matmul %113, %14, %cst_45 {dimension_numbers = #tpu.dot_dimension_numbers<[1], [0], [0], [1], [0, 0, 1, 1], [], []>} : vector<2x32xf32>, vector<32x32xf32>, vector<2x32xf32> -> vector<2x32xf32>
    %121 = tpu.concatenate %120, %120, %120, %120, %120, %120, %120, %120 in 0 : vector<2x32xf32>, vector<2x32xf32>, vector<2x32xf32>, vector<2x32xf32>, vector<2x32xf32>, vector<2x32xf32>, vector<2x32xf32>, vector<2x32xf32> -> vector<16x32xf32>
    %122 = arith.addf %46, %121 : vector<16x32xf32>
    %cst_46 = arith.constant dense<0.000000e+00> : vector<16x32xf32>
    %123 = tpu.matmul %122, %15, %cst_46 {dimension_numbers = #tpu.dot_dimension_numbers<[1], [0], [0], [1], [0, 0, 1, 1], [], []>} : vector<16x32xf32>, vector<32x32xf32>, vector<16x32xf32> -> vector<16x32xf32>
    %124 = tpu.transpose %46, [1, 0] : vector<16x32xf32> -> vector<32x16xf32>
    %cst_47 = arith.constant dense<0.000000e+00> : vector<16x16xf32>
    %125 = tpu.matmul %123, %124, %cst_47 {dimension_numbers = #tpu.dot_dimension_numbers<[1], [0], [0], [1], [0, 0, 1, 1], [], []>} : vector<16x32xf32>, vector<32x16xf32>, vector<16x16xf32> -> vector<16x16xf32>
    %126 = arith.addf %125, %75 : vector<16x16xf32>
    %cst_48 = arith.constant dense<0xFF800000> : vector<16xf32>
    %127 = vector.multi_reduction <maximumf>, %126, %cst_48 [1] : vector<16x16xf32> to vector<16xf32>
    %128 = vector.shape_cast %127 : vector<16xf32> to vector<16x1xf32>
    %129 = vector.broadcast %128 : vector<16x1xf32> to vector<16x16xf32>
    %130 = arith.subf %126, %129 : vector<16x16xf32>
    %131 = math.exp %130 : vector<16x16xf32>
    %cst_49 = arith.constant dense<0.000000e+00> : vector<16xf32>
    %132 = vector.multi_reduction <add>, %131, %cst_49 [1] : vector<16x16xf32> to vector<16xf32>
    %133 = vector.shape_cast %132 : vector<16xf32> to vector<16x1xf32>
    %134 = tpu.reciprocal %133 {approx = true} : vector<16x1xf32> -> vector<16x1xf32>
    %135 = vector.broadcast %134 : vector<16x1xf32> to vector<16x16xf32>
    %136 = arith.mulf %131, %135 : vector<16x16xf32>
    %cst_50 = arith.constant dense<0.000000e+00> : vector<16x32xf32>
    %137 = tpu.matmul %136, %46, %cst_50 {dimension_numbers = #tpu.dot_dimension_numbers<[1], [0], [0], [1], [0, 0, 1, 1], [], []>} : vector<16x16xf32>, vector<16x32xf32>, vector<16x32xf32> -> vector<16x32xf32>
    %138 = tpu.concatenate %46, %137 in 1 : vector<16x32xf32>, vector<16x32xf32> -> vector<16x64xf32>
    %c128_51 = arith.constant 128 : index
    %c0_52 = arith.constant 0 : index
    %139 = vector.load %arg3[%c128_51, %c0_52] : memref<192x128xf32, #tpu.memory_space<vmem>>, vector<64x128xf32>
    %cst_53 = arith.constant dense<0.000000e+00> : vector<16x128xf32>
    %140 = tpu.matmul %138, %139, %cst_53 {dimension_numbers = #tpu.dot_dimension_numbers<[1], [0], [0], [1], [0, 0, 1, 1], [], []>} : vector<16x64xf32>, vector<64x128xf32>, vector<16x128xf32> -> vector<16x128xf32>
    %c2 = arith.constant 2 : index
    %c0_54 = arith.constant 0 : index
    %141 = vector.load %arg4[%c2, %c0_54] : memref<3x128xf32, #tpu.memory_space<vmem>>, vector<1x128xf32>
    %142 = vector.broadcast %141 : vector<1x128xf32> to vector<16x128xf32>
    %143 = arith.addf %140, %142 : vector<16x128xf32>
    %c0_55 = arith.constant 0 : index
    %c0_56 = arith.constant 0 : index
    %144 = vector.load %arg5[%c0_55, %c0_56] : memref<20x128xf32, #tpu.memory_space<vmem>>, vector<16x128xf32>
    tpu.vector_store %arg5[%c0_55, %c0_56], %143 {strides = array<i32>} : memref<20x128xf32, #tpu.memory_space<vmem>>, vector<16x128xf32>,
    %c16 = arith.constant 16 : index
    %c0_57 = arith.constant 0 : index
    %145 = vector.load %arg5[%c16, %c0_57] : memref<20x128xf32, #tpu.memory_space<vmem>>, vector<2x128xf32>
    tpu.vector_store %arg5[%c16, %c0_57], %96 {strides = array<i32>} : memref<20x128xf32, #tpu.memory_space<vmem>>, vector<2x128xf32>,
    %c18 = arith.constant 18 : index
    %c0_58 = arith.constant 0 : index
    %146 = vector.load %arg5[%c18, %c0_58] : memref<20x128xf32, #tpu.memory_space<vmem>>, vector<2x128xf32>
    tpu.vector_store %arg5[%c18, %c0_58], %119 {strides = array<i32>} : memref<20x128xf32, #tpu.memory_space<vmem>>, vector<2x128xf32>,
    return
  }
}

</mosaic_0001>

<llo_original>
// kernel: tile.7
$region0: #{tile.7}
  %s0 = inlined_call_operand.vmem [shape: s32[8,1,1,2], index: 0, kind: input, shape index: {}]
  %s1 = inlined_call_operand.vmem [shape: s32[16,1], index: 1, kind: output, shape index: {}]
  $region1: #{tile.7} parent=0
    #allocation0 [shape = 'u8[4096]{0}', space=vmem, size = 0x1000, scoped, tag = 'scoped mem for output reshape']
    %v2 = vld [vmem:[%s0] sm:$0x1]
    %vm3 = vcmask 15360
    %4 = vst.msk [vmem:[#allocation0] sm:$0x1] %vm3, %v2
    %s5 = scalar_lea.vmem %s0, 7
    %v6 = vld [vmem:[%s5] sm:$0x1]
    %7 = vrot.lane.b32.xlu0 %v6, 14
    %v8 = vpop.permute.xlu0 %7
    %vm9 = vcmask 130160
    %10 = vst.msk [vmem:[#allocation0] sm:$0x1] %vm9, %v8
    %s11 = scalar_lea.vmem %s0, 6
    %v12 = vld [vmem:[%s11] sm:$0x1]
    %13 = vrot.lane.b32.xlu0 %v12, 12
    %v14 = vpop.permute.xlu0 %13
    %vm15 = vcmask 113760
    %16 = vst.msk [vmem:[#allocation0] sm:$0x1] %vm15, %v14
    %s17 = scalar_lea.vmem %s0, 5
    %v18 = vld [vmem:[%s17] sm:$0x1]
    %19 = vrot.lane.b32.xlu0 %v18, 10
    %v20 = vpop.permute.xlu0 %19
    %vm21 = vcmask 97360
    %22 = vst.msk [vmem:[#allocation0] sm:$0x1] %vm21, %v20
    %s23 = scalar_lea.vmem %s0, 4
    %v24 = vld [vmem:[%s23] sm:$0x1]
    %25 = vrot.lane.b32.xlu0 %v24, 8
    %v26 = vpop.permute.xlu0 %25
    %vm27 = vcmask 80960
    %28 = vst.msk [vmem:[#allocation0] sm:$0x1] %vm27, %v26
    %s29 = scalar_lea.vmem %s0, 3
    %v30 = vld [vmem:[%s29] sm:$0x1]
    %31 = vrot.lane.b32.xlu0 %v30, 6
    %v32 = vpop.permute.xlu0 %31
    %vm33 = vcmask 64560
    %34 = vst.msk [vmem:[#allocation0] sm:$0x1] %vm33, %v32
    %s35 = scalar_lea.vmem %s0, 2
    %v36 = vld [vmem:[%s35] sm:$0x1]
    %37 = vrot.lane.b32.xlu0 %v36, 4
    %v38 = vpop.permute.xlu0 %37
    %vm39 = vcmask 48160
    %40 = vst.msk [vmem:[#allocation0] sm:$0x1] %vm39, %v38
    %s41 = scalar_lea.vmem %s0, 1
    %v42 = vld [vmem:[%s41] sm:$0x1]
    %43 = vrot.lane.b32.xlu0 %v42, 2
    %v44 = vpop.permute.xlu0 %43
    %vm45 = vcmask 31760
    %46 = vst.msk [vmem:[#allocation0] sm:$0x1] %vm45, %v44
    %s48 = sshll.u32 1, 1
    %s49 = ssub.s32 %s48, 1
    %v51 = vld [vmem:[#allocation0] sm:%s49]
    %s52 = sshll.u32 1, 1
    %s53 = ssub.s32 %s52, 1
    %54 = vst [vmem:[%s1] sm:%s53] %v51

// kernel: tile.6
$region0: #{tile.6}
  #allocation2 [shape = 's32[1]{0}', space=sflag, size = 0x4, scoped, tag = 'scoped memory for tile.6']
  %s0 = inlined_call_operand.hbm [shape: s32[2], index: 0, kind: input, shape index: {}]
  %s1 = inlined_call_operand.vmem [shape: s32[8,1,1,2], index: 1, kind: output, shape index: {}]
  $region1: #{tile.6} parent=0
    #allocation0 [shape = 'u8[512]{0}', space=vmem, size = 0x400, scoped, tag = 'operand span for operand 0']
    #allocation1 [shape = 's32[1]{0}', space=sflag, size = 0x4, scoped, tag = 'scoped memory for tile.6']
    %2 = vsyncpa [#allocation1], 0
    // Predicated region
    $region2: #{tile.6} parent=1 // pred_check
      _
    $region3: #{tile.6} parent=1 // pred_check_branch
      %4 = sbr.rel (0) target = $region5
    $region4: #{tile.6} parent=1 // pred_region
      %s6 = ssub.s32 16, 16
      %7 = vsyncadd [#allocation1], %s6
      %s9 = sshll.u32 [#allocation0], 4
      %s10 = int_to_ptr.vmem [resolvable:$true] %s9
      %12 = dma.hbm_to_vmem [thread:$0]  %s0, 16, %s10, [#allocation1]
    $region5: #{tile.6} parent=1 // pred_fallthru
      _
    // Predicated region
    $region6: #{tile.6} parent=1 // pred_check
      _
    $region7: #{tile.6} parent=1 // pred_check_branch
      %14 = sbr.rel (0) target = $region9
    $region8: #{tile.6} parent=1 // pred_region
      %15 = dma.done [#allocation1], 16
    $region9: #{tile.6} parent=1 // pred_fallthru
      _
    %v16 = vld [vmem:[#allocation0] ss:$0 sm:$0xff]
    %17 = vst [vmem:[%s1] sm:$0xff] %v16
    %18 = vsyncpa [#allocation1], 1

// kernel: seq2seq_forward.1
$region0: #{seq2seq_forward.1}
  #allocation0 [shape = 'u32[]', space=smem, size = 0x4, offset = 0x4, fixed_abs, tag = 'smem constant byte address 0x4 - core index']
  #allocation1 [shape = 'u32[144,128]{1,0:T(1,128)}', space=vmem, size = 0x12000, scoped, tag = 'internal scratch']
  %s0 = inlined_call_operand.vmem [shape: s32[16,2], index: 0, kind: input, shape index: {}]
  %s1 = inlined_call_operand.vmem [shape: f32[50,32], index: 1, kind: input, shape index: {}]
  %s2 = inlined_call_operand.vmem [shape: f32[192,32], index: 2, kind: input, shape index: {}]
  %s3 = inlined_call_operand.vmem [shape: f32[192,128], index: 3, kind: input, shape index: {}]
  %s4 = inlined_call_operand.vmem [shape: f32[3,128], index: 4, kind: input, shape index: {}]
  %s5 = inlined_call_operand.vmem [shape: f32[20,128], index: 5, kind: output, shape index: {}]
  %s6 = sld [smem:[#allocation0]]
  $region30: #{seq2seq_forward.1} parent=0
    _
  %s8 = ssub.s32 1, %s6
  %s9 = scalar_select 0, %s8, %s6
  // Predicated region
  $region2: #{seq2seq_forward.1} parent=0 // pred_check
    _
  $region3: #{seq2seq_forward.1} parent=0 // pred_check_branch
    %11 = sbr.rel (0) target = $region5
  $region4: #{seq2seq_forward.1} parent=0 // pred_region
    _
  $region5: #{seq2seq_forward.1} parent=0 // pred_fallthru
    _
  // Predicated region
  $region6: #{seq2seq_forward.1} parent=0 // pred_check
    _
  $region7: #{seq2seq_forward.1} parent=0 // pred_check_branch
    %13 = sbr.rel (0) target = $region9
  $region8: #{seq2seq_forward.1} parent=0 // pred_region
    _
  $region9: #{seq2seq_forward.1} parent=0 // pred_fallthru
    _
  // Predicated region
  $region10: #{seq2seq_forward.1} parent=0 // pred_check
    _
  $region11: #{seq2seq_forward.1} parent=0 // pred_check_branch
    %15 = sbr.rel (0) target = $region13
  $region12: #{seq2seq_forward.1} parent=0 // pred_region
    _
  $region13: #{seq2seq_forward.1} parent=0 // pred_fallthru
    _
  // Predicated region
  $region14: #{seq2seq_forward.1} parent=0 // pred_check
    _
  $region15: #{seq2seq_forward.1} parent=0 // pred_check_branch
    %17 = sbr.rel (0) target = $region17
  $region16: #{seq2seq_forward.1} parent=0 // pred_region
    _
  $region17: #{seq2seq_forward.1} parent=0 // pred_fallthru
    _
  // Predicated region
  $region18: #{seq2seq_forward.1} parent=0 // pred_check
    _
  $region19: #{seq2seq_forward.1} parent=0 // pred_check_branch
    %19 = sbr.rel (0) target = $region21
  $region20: #{seq2seq_forward.1} parent=0 // pred_region
    _
  $region21: #{seq2seq_forward.1} parent=0 // pred_fallthru
    _
  %v20 = vld [vmem:[%s0] sm:$0xff]
  %v21 = vld [vmem:[%s0 + $0x8] sm:$0xff]
  %v22 = vlaneseq
  %v23 = vand.u32 %v22, 127
  %24 = vset.pattern.permute.xlu0 0
  %25 = vperm.xlu0 %24, %v20
  %v26 = vpop.permute.xlu0 %25
  %27 = vset.pattern.permute.xlu0 0
  %28 = vperm.xlu0 %27, %v21
  %v29 = vpop.permute.xlu0 %28
  %vm30 = vcmp.eq.s32.totalorder %v26, %v23
  %vm31 = vcmp.eq.s32.totalorder %v29, %v23
  %v32 = vsel %vm30, 1, 0
  %v33 = vsel %vm31, 1, 0
  %v34 = vcvt.s32.f32 %v32
  %v35 = vcvt.s32.f32 %v33
  %v36 = vld [vmem:[%s1] sm:$0xff]
  %v37 = vld [vmem:[%s1 + $0x8] sm:$0xff]
  %v38 = vld [vmem:[%s1 + $0x10] sm:$0xff]
  %v39 = vld [vmem:[%s1 + $0x18] sm:$0xff]
  %v40 = vld [vmem:[%s1 + $0x20] sm:$0xff]
  %v41 = vld [vmem:[%s1 + $0x28] sm:$0xff]
  %v42 = vld [vmem:[%s1 + $0x30] sm:$0x3]
  %vm43 = vcmask 408576
  %v45 = vsel %vm43, %v34, 0
  %v48 = vsel %vm43, %v35, 0
  %vm50 = vcmask 1041408
  %v52 = vsel %vm50, %v42, 0
  %54 = vmatprep.subr.mxu0 0.0
  %55 = vmatpush1.msra.mxu0 0.0
  %56 = vmatprep.subr.mxu0 0.0
  %57 = vmatpush1.msra.mxu0 0.0
  %58 = vmatprep.subr.mxu0 0.0
  %59 = vmatpush1.msra.mxu0 0.0
  %60 = vmatprep.subr.mxu0 0.0
  %61 = vmatpush1.msra.mxu0 0.0
  %62 = vmatprep.subr.mxu0 0.0
  %63 = vmatpush1.msra.mxu0 0.0
  %64 = vmatprep.subr.mxu0 0.0
  %65 = vmatpush1.msra.mxu0 0.0
  %66 = vmatprep.subr.mxu0 0.0
  %67 = vmatpush1.msra.mxu0 0.0
  %68 = vmatprep.subr.mxu0 0.0
  %69 = vmatpush1.msra.mxu0 0.0
  %70 = vmatprep.subr.mxu0 0.0
  %71 = vmatpush1.msra.mxu0 0.0
  %72 = vmatprep.subr.mxu0 0.0
  %73 = vmatpush1.msra.mxu0 %v52
  %74 = vmatprep.subr.mxu0 0.0
  %75 = vmatpush1.msra.mxu0 %v41
  %76 = vmatprep.subr.mxu0 0.0
  %77 = vmatpush1.msra.mxu0 %v40
  %78 = vmatprep.subr.mxu0 0.0
  %79 = vmatpush1.msra.mxu0 %v39
  %80 = vmatprep.subr.mxu0 0.0
  %81 = vmatpush1.msra.mxu0 %v38
  %82 = vmatprep.subr.mxu0 0.0
  %83 = vmatpush1.msra.mxu0 %v37
  %84 = vmatprep.subr.mxu0 0.0
  %85 = vmatpush1.msra.mxu0 %v36
  %86 = vmatprep.subr.mxu0 0.0
  %87 = vmatpush2.msra.mxu0 0.0
  %88 = vmatprep.subr.mxu0 0.0
  %89 = vmatpush2.msra.mxu0 0.0
  %90 = vmatprep.subr.mxu0 0.0
  %91 = vmatpush2.msra.mxu0 0.0
  %92 = vmatprep.subr.mxu0 0.0
  %93 = vmatpush2.msra.mxu0 0.0
  %94 = vmatprep.subr.mxu0 0.0
  %95 = vmatpush2.msra.mxu0 0.0
  %96 = vmatprep.subr.mxu0 0.0
  %97 = vmatpush2.msra.mxu0 0.0
  %98 = vmatprep.subr.mxu0 0.0
  %99 = vmatpush2.msra.mxu0 0.0
  %100 = vmatprep.subr.mxu0 0.0
  %101 = vmatpush2.msra.mxu0 0.0
  %102 = vmatprep.subr.mxu0 0.0
  %103 = vmatpush2.msra.mxu0 0.0
  %104 = vmatprep.subr.mxu0 0.0
  %105 = vmatpush2.msra.mxu0 0.0
  %106 = vmatprep.subr.mxu0 0.0
  %107 = vmatpush2.msra.mxu0 0.0
  %108 = vmatprep.subr.mxu0 0.0
  %109 = vmatpush2.msra.mxu0 0.0
  %110 = vmatprep.subr.mxu0 0.0
  %111 = vmatpush2.msra.mxu0 0.0
  %112 = vmatprep.subr.mxu0 0.0
  %113 = vmatpush2.msra.mxu0 0.0
  %114 = vmatprep.subr.mxu0 0.0
  %115 = vmatpush2.msra.mxu0 0.0
  %116 = vmatprep.subr.mxu0 0.0
  %117 = vmatpush2.msra.mxu0 0.0
  %118 = vmatprep.mubr.f32.mxu0 0.0
  %119 = vmatmul.mubr.f32.gmra.mxu0 %v45
  %v120 = vpop.f32.mrf.mxu0
  %v121 = vadd.f32 0.0, %v120
  %v122 = vpop.f32.mrf.mxu0
  %123 = vmatprep.mubr.f32.mxu0 0.0
  %124 = vmatmul.mubr.f32.gmra.mxu0 %v48
  %v125 = vpop.f32.mrf.mxu0
  %v126 = vadd.f32 0.0, %v125
  %v127 = vpop.f32.mrf.mxu0
  %128 = vdwg.mxu0
  %v129 = vld [vmem:[%s2] sm:$0xff]
  %v130 = vld [vmem:[%s2 + $0x8] sm:$0xff]
  %v131 = vld [vmem:[%s2 + $0x10] sm:$0xff]
  %v132 = vld [vmem:[%s2 + $0x18] sm:$0xff]
  %v133 = vld [vmem:[%s2 + $0x20] sm:$0xff]
  %v134 = vld [vmem:[%s2 + $0x28] sm:$0xff]
  %v135 = vld [vmem:[%s2 + $0x30] sm:$0xff]
  %v136 = vld [vmem:[%s2 + $0x38] sm:$0xff]
  %v137 = vld [vmem:[%s2 + $0x40] sm:$0xff]
  %v138 = vld [vmem:[%s2 + $0x48] sm:$0xff]
  %v139 = vld [vmem:[%s2 + $0x50] sm:$0xff]
  %v140 = vld [vmem:[%s2 + $0x58] sm:$0xff]
  %v141 = vld [vmem:[%s2 + $0x60] sm:$0xff]
  %v142 = vld [vmem:[%s2 + $0x68] sm:$0xff]
  %v143 = vld [vmem:[%s2 + $0x70] sm:$0xff]
  %v144 = vld [vmem:[%s2 + $0x78] sm:$0xff]
  %v145 = vld [vmem:[%s2 + $0x80] sm:$0xff]
  %v146 = vld [vmem:[%s2 + $0x88] sm:$0xff]
  %v147 = vld [vmem:[%s2 + $0x90] sm:$0xff]
  %v148 = vld [vmem:[%s2 + $0x98] sm:$0xff]
  %v149 = vld [vmem:[%s2 + $0xa0] sm:$0xff]
  %v150 = vld [vmem:[%s2 + $0xa8] sm:$0xff]
  %v151 = vld [vmem:[%s2 + $0xb0] sm:$0xff]
  %v152 = vld [vmem:[%s2 + $0xb8] sm:$0xff]
  %v153 = vtanh.pop %v121
  %vm154 = vcmask 261120
  %v156 = vsel %vm154, %v153, 0
  %158 = vmatprep.subr.mxu0 0.0
  %159 = vmatpush1.msra.mxu0 0.0
  %160 = vmatprep.subr.mxu0 0.0
  %161 = vmatpush1.msra.mxu0 0.0
  %162 = vmatprep.subr.mxu0 0.0
  %163 = vmatpush1.msra.mxu0 0.0
  %164 = vmatprep.subr.mxu0 0.0
  %165 = vmatpush1.msra.mxu0 0.0
  %166 = vmatprep.subr.mxu0 0.0
  %167 = vmatpush1.msra.mxu0 0.0
  %168 = vmatprep.subr.mxu0 0.0
  %169 = vmatpush1.msra.mxu0 0.0
  %170 = vmatprep.subr.mxu0 0.0
  %171 = vmatpush1.msra.mxu0 0.0
  %172 = vmatprep.subr.mxu0 0.0
  %173 = vmatpush1.msra.mxu0 0.0
  %174 = vmatprep.subr.mxu0 0.0
  %175 = vmatpush1.msra.mxu0 0.0
  %176 = vmatprep.subr.mxu0 0.0
  %177 = vmatpush1.msra.mxu0 0.0
  %178 = vmatprep.subr.mxu0 0.0
  %179 = vmatpush1.msra.mxu0 0.0
  %180 = vmatprep.subr.mxu0 0.0
  %181 = vmatpush1.msra.mxu0 0.0
  %182 = vmatprep.subr.mxu0 0.0
  %183 = vmatpush1.msra.mxu0 %v132
  %184 = vmatprep.subr.mxu0 0.0
  %185 = vmatpush1.msra.mxu0 %v131
  %186 = vmatprep.subr.mxu0 0.0
  %187 = vmatpush1.msra.mxu0 %v130
  %188 = vmatprep.subr.mxu0 0.0
  %189 = vmatpush1.msra.mxu0 %v129
  %190 = vmatprep.subr.mxu0 0.0
  %191 = vmatpush2.msra.mxu0 0.0
  %192 = vmatprep.subr.mxu0 0.0
  %193 = vmatpush2.msra.mxu0 0.0
  %194 = vmatprep.subr.mxu0 0.0
  %195 = vmatpush2.msra.mxu0 0.0
  %196 = vmatprep.subr.mxu0 0.0
  %197 = vmatpush2.msra.mxu0 0.0
  %198 = vmatprep.subr.mxu0 0.0
  %199 = vmatpush2.msra.mxu0 0.0
  %200 = vmatprep.subr.mxu0 0.0
  %201 = vmatpush2.msra.mxu0 0.0
  %202 = vmatprep.subr.mxu0 0.0
  %203 = vmatpush2.msra.mxu0 0.0
  %204 = vmatprep.subr.mxu0 0.0
  %205 = vmatpush2.msra.mxu0 0.0
  %206 = vmatprep.subr.mxu0 0.0
  %207 = vmatpush2.msra.mxu0 0.0
  %208 = vmatprep.subr.mxu0 0.0
  %209 = vmatpush2.msra.mxu0 0.0
  %210 = vmatprep.subr.mxu0 0.0
  %211 = vmatpush2.msra.mxu0 0.0
  %212 = vmatprep.subr.mxu0 0.0
  %213 = vmatpush2.msra.mxu0 0.0
  %214 = vmatprep.subr.mxu0 0.0
  %215 = vmatpush2.msra.mxu0 0.0
  %216 = vmatprep.subr.mxu0 0.0
  %217 = vmatpush2.msra.mxu0 0.0
  %218 = vmatprep.subr.mxu0 0.0
  %219 = vmatpush2.msra.mxu0 0.0
  %220 = vmatprep.subr.mxu0 0.0
  %221 = vmatpush2.msra.mxu0 0.0
  %222 = vmatprep.mubr.f32.mxu0 0.0
  %223 = vmatmul.mubr.f32.gmra.mxu0 %v156
  %v224 = vpop.f32.mrf.mxu0
  %v225 = vadd.f32 0.0, %v224
  %v226 = vpop.f32.mrf.mxu0
  %227 = vdwg.mxu0
  %v229 = vrot.slane %v225, 6
  %v231 = vadd.f32 %v121, %v229
  %v232 = vtanh.pop %v231
  %v234 = vrot.slane %v232, 2
  %v235 = vsel %vm154, %v234, 0
  %237 = vmatprep.subr.mxu0 0.0
  %238 = vmatpush1.msra.mxu0 0.0
  %239 = vmatprep.subr.mxu0 0.0
  %240 = vmatpush1.msra.mxu0 0.0
  %241 = vmatprep.subr.mxu0 0.0
  %242 = vmatpush1.msra.mxu0 0.0
  %243 = vmatprep.subr.mxu0 0.0
  %244 = vmatpush1.msra.mxu0 0.0
  %245 = vmatprep.subr.mxu0 0.0
  %246 = vmatpush1.msra.mxu0 0.0
  %247 = vmatprep.subr.mxu0 0.0
  %248 = vmatpush1.msra.mxu0 0.0
  %249 = vmatprep.subr.mxu0 0.0
  %250 = vmatpush1.msra.mxu0 0.0
  %251 = vmatprep.subr.mxu0 0.0
  %252 = vmatpush1.msra.mxu0 0.0
  %253 = vmatprep.subr.mxu0 0.0
  %254 = vmatpush1.msra.mxu0 0.0
  %255 = vmatprep.subr.mxu0 0.0
  %256 = vmatpush1.msra.mxu0 0.0
  %257 = vmatprep.subr.mxu0 0.0
  %258 = vmatpush1.msra.mxu0 0.0
  %259 = vmatprep.subr.mxu0 0.0
  %260 = vmatpush1.msra.mxu0 0.0
  %261 = vmatprep.subr.mxu0 0.0
  %262 = vmatpush1.msra.mxu0 %v132
  %263 = vmatprep.subr.mxu0 0.0
  %264 = vmatpush1.msra.mxu0 %v131
  %265 = vmatprep.subr.mxu0 0.0
  %266 = vmatpush1.msra.mxu0 %v130
  %267 = vmatprep.subr.mxu0 0.0
  %268 = vmatpush1.msra.mxu0 %v129
  %269 = vmatprep.subr.mxu0 0.0
  %270 = vmatpush2.msra.mxu0 0.0
  %271 = vmatprep.subr.mxu0 0.0
  %272 = vmatpush2.msra.mxu0 0.0
  %273 = vmatprep.subr.mxu0 0.0
  %274 = vmatpush2.msra.mxu0 0.0
  %275 = vmatprep.subr.mxu0 0.0
  %276 = vmatpush2.msra.mxu0 0.0
  %277 = vmatprep.subr.mxu0 0.0
  %278 = vmatpush2.msra.mxu0 0.0
  %279 = vmatprep.subr.mxu0 0.0
  %280 = vmatpush2.msra.mxu0 0.0
  %281 = vmatprep.subr.mxu0 0.0
  %282 = vmatpush2.msra.mxu0 0.0
  %283 = vmatprep.subr.mxu0 0.0
  %284 = vmatpush2.msra.mxu0 0.0
  %285 = vmatprep.subr.mxu0 0.0
  %286 = vmatpush2.msra.mxu0 0.0
  %287 = vmatprep.subr.mxu0 0.0
  %288 = vmatpush2.msra.mxu0 0.0
  %289 = vmatprep.subr.mxu0 0.0
  %290 = vmatpush2.msra.mxu0 0.0
  %291 = vmatprep.subr.mxu0 0.0
  %292 = vmatpush2.msra.mxu0 0.0
  %293 = vmatprep.subr.mxu0 0.0
  %294 = vmatpush2.msra.mxu0 0.0
  %295 = vmatprep.subr.mxu0 0.0
  %296 = vmatpush2.msra.mxu0 0.0
  %297 = vmatprep.subr.mxu0 0.0
  %298 = vmatpush2.msra.mxu0 0.0
  %299 = vmatprep.subr.mxu0 0.0
  %300 = vmatpush2.msra.mxu0 0.0
  %301 = vmatprep.mubr.f32.mxu0 0.0
  %302 = vmatmul.mubr.f32.gmra.mxu0 %v235
  %v303 = vpop.f32.mrf.mxu0
  %v304 = vadd.f32 0.0, %v303
  %v305 = vpop.f32.mrf.mxu0
  %306 = vdwg.mxu0
  %v308 = vrot.slane %v304, 4
  %v310 = vadd.f32 %v121, %v308
  %v311 = vtanh.pop %v310
  %v313 = vrot.slane %v311, 4
  %v314 = vsel %vm154, %v313, 0
  %316 = vmatprep.subr.mxu0 0.0
  %317 = vmatpush1.msra.mxu0 0.0
  %318 = vmatprep.subr.mxu0 0.0
  %319 = vmatpush1.msra.mxu0 0.0
  %320 = vmatprep.subr.mxu0 0.0
  %321 = vmatpush1.msra.mxu0 0.0
  %322 = vmatprep.subr.mxu0 0.0
  %323 = vmatpush1.msra.mxu0 0.0
  %324 = vmatprep.subr.mxu0 0.0
  %325 = vmatpush1.msra.mxu0 0.0
  %326 = vmatprep.subr.mxu0 0.0
  %327 = vmatpush1.msra.mxu0 0.0
  %328 = vmatprep.subr.mxu0 0.0
  %329 = vmatpush1.msra.mxu0 0.0
  %330 = vmatprep.subr.mxu0 0.0
  %331 = vmatpush1.msra.mxu0 0.0
  %332 = vmatprep.subr.mxu0 0.0
  %333 = vmatpush1.msra.mxu0 0.0
  %334 = vmatprep.subr.mxu0 0.0
  %335 = vmatpush1.msra.mxu0 0.0
  %336 = vmatprep.subr.mxu0 0.0
  %337 = vmatpush1.msra.mxu0 0.0
  %338 = vmatprep.subr.mxu0 0.0
  %339 = vmatpush1.msra.mxu0 0.0
  %340 = vmatprep.subr.mxu0 0.0
  %341 = vmatpush1.msra.mxu0 %v132
  %342 = vmatprep.subr.mxu0 0.0
  %343 = vmatpush1.msra.mxu0 %v131
  %344 = vmatprep.subr.mxu0 0.0
  %345 = vmatpush1.msra.mxu0 %v130
  %346 = vmatprep.subr.mxu0 0.0
  %347 = vmatpush1.msra.mxu0 %v129
  %348 = vmatprep.subr.mxu0 0.0
  %349 = vmatpush2.msra.mxu0 0.0
  %350 = vmatprep.subr.mxu0 0.0
  %351 = vmatpush2.msra.mxu0 0.0
  %352 = vmatprep.subr.mxu0 0.0
  %353 = vmatpush2.msra.mxu0 0.0
  %354 = vmatprep.subr.mxu0 0.0
  %355 = vmatpush2.msra.mxu0 0.0
  %356 = vmatprep.subr.mxu0 0.0
  %357 = vmatpush2.msra.mxu0 0.0
  %358 = vmatprep.subr.mxu0 0.0
  %359 = vmatpush2.msra.mxu0 0.0
  %360 = vmatprep.subr.mxu0 0.0
  %361 = vmatpush2.msra.mxu0 0.0
  %362 = vmatprep.subr.mxu0 0.0
  %363 = vmatpush2.msra.mxu0 0.0
  %364 = vmatprep.subr.mxu0 0.0
  %365 = vmatpush2.msra.mxu0 0.0
  %366 = vmatprep.subr.mxu0 0.0
  %367 = vmatpush2.msra.mxu0 0.0
  %368 = vmatprep.subr.mxu0 0.0
  %369 = vmatpush2.msra.mxu0 0.0
  %370 = vmatprep.subr.mxu0 0.0
  %371 = vmatpush2.msra.mxu0 0.0
  %372 = vmatprep.subr.mxu0 0.0
  %373 = vmatpush2.msra.mxu0 0.0
  %374 = vmatprep.subr.mxu0 0.0
  %375 = vmatpush2.msra.mxu0 0.0
  %376 = vmatprep.subr.mxu0 0.0
  %377 = vmatpush2.msra.mxu0 0.0
  %378 = vmatprep.subr.mxu0 0.0
  %379 = vmatpush2.msra.mxu0 0.0
  %380 = vmatprep.mubr.f32.mxu0 0.0
  %381 = vmatmul.mubr.f32.gmra.mxu0 %v314
  %v382 = vpop.f32.mrf.mxu0
  %v383 = vadd.f32 0.0, %v382
  %v384 = vpop.f32.mrf.mxu0
  %385 = vdwg.mxu0
  %v387 = vrot.slane %v383, 2
  %v389 = vadd.f32 %v121, %v387
  %v390 = vtanh.pop %v389
  %v392 = vrot.slane %v390, 6
  %v393 = vsel %vm154, %v392, 0
  %395 = vmatprep.subr.mxu0 0.0
  %396 = vmatpush1.msra.mxu0 0.0
  %397 = vmatprep.subr.mxu0 0.0
  %398 = vmatpush1.msra.mxu0 0.0
  %399 = vmatprep.subr.mxu0 0.0
  %400 = vmatpush1.msra.mxu0 0.0
  %401 = vmatprep.subr.mxu0 0.0
  %402 = vmatpush1.msra.mxu0 0.0
  %403 = vmatprep.subr.mxu0 0.0
  %404 = vmatpush1.msra.mxu0 0.0
  %405 = vmatprep.subr.mxu0 0.0
  %406 = vmatpush1.msra.mxu0 0.0
  %407 = vmatprep.subr.mxu0 0.0
  %408 = vmatpush1.msra.mxu0 0.0
  %409 = vmatprep.subr.mxu0 0.0
  %410 = vmatpush1.msra.mxu0 0.0
  %411 = vmatprep.subr.mxu0 0.0
  %412 = vmatpush1.msra.mxu0 0.0
  %413 = vmatprep.subr.mxu0 0.0
  %414 = vmatpush1.msra.mxu0 0.0
  %415 = vmatprep.subr.mxu0 0.0
  %416 = vmatpush1.msra.mxu0 0.0
  %417 = vmatprep.subr.mxu0 0.0
  %418 = vmatpush1.msra.mxu0 0.0
  %419 = vmatprep.subr.mxu0 0.0
  %420 = vmatpush1.msra.mxu0 %v132
  %421 = vmatprep.subr.mxu0 0.0
  %422 = vmatpush1.msra.mxu0 %v131
  %423 = vmatprep.subr.mxu0 0.0
  %424 = vmatpush1.msra.mxu0 %v130
  %425 = vmatprep.subr.mxu0 0.0
  %426 = vmatpush1.msra.mxu0 %v129
  %427 = vmatprep.subr.mxu0 0.0
  %428 = vmatpush2.msra.mxu0 0.0
  %429 = vmatprep.subr.mxu0 0.0
  %430 = vmatpush2.msra.mxu0 0.0
  %431 = vmatprep.subr.mxu0 0.0
  %432 = vmatpush2.msra.mxu0 0.0
  %433 = vmatprep.subr.mxu0 0.0
  %434 = vmatpush2.msra.mxu0 0.0
  %435 = vmatprep.subr.mxu0 0.0
  %436 = vmatpush2.msra.mxu0 0.0
  %437 = vmatprep.subr.mxu0 0.0
  %438 = vmatpush2.msra.mxu0 0.0
  %439 = vmatprep.subr.mxu0 0.0
  %440 = vmatpush2.msra.mxu0 0.0
  %441 = vmatprep.subr.mxu0 0.0
  %442 = vmatpush2.msra.mxu0 0.0
  %443 = vmatprep.subr.mxu0 0.0
  %444 = vmatpush2.msra.mxu0 0.0
  %445 = vmatprep.subr.mxu0 0.0
  %446 = vmatpush2.msra.mxu0 0.0
  %447 = vmatprep.subr.mxu0 0.0
  %448 = vmatpush2.msra.mxu0 0.0
  %449 = vmatprep.subr.mxu0 0.0
  %450 = vmatpush2.msra.mxu0 0.0
  %451 = vmatprep.subr.mxu0 0.0
  %452 = vmatpush2.msra.mxu0 0.0
  %453 = vmatprep.subr.mxu0 0.0
  %454 = vmatpush2.msra.mxu0 0.0
  %455 = vmatprep.subr.mxu0 0.0
  %456 = vmatpush2.msra.mxu0 0.0
  %457 = vmatprep.subr.mxu0 0.0
  %458 = vmatpush2.msra.mxu0 0.0
  %459 = vmatprep.mubr.f32.mxu0 0.0
  %460 = vmatmul.mubr.f32.gmra.mxu0 %v393
  %v461 = vpop.f32.mrf.mxu0
  %v462 = vadd.f32 0.0, %v461
  %v463 = vpop.f32.mrf.mxu0
  %464 = vdwg.mxu0
  %v465 = vadd.f32 %v126, %v462
  %v466 = vtanh.pop %v465
  %v468 = vsel %vm154, %v466, 0
  %470 = vmatprep.subr.mxu0 0.0
  %471 = vmatpush1.msra.mxu0 0.0
  %472 = vmatprep.subr.mxu0 0.0
  %473 = vmatpush1.msra.mxu0 0.0
  %474 = vmatprep.subr.mxu0 0.0
  %475 = vmatpush1.msra.mxu0 0.0
  %476 = vmatprep.subr.mxu0 0.0
  %477 = vmatpush1.msra.mxu0 0.0
  %478 = vmatprep.subr.mxu0 0.0
  %479 = vmatpush1.msra.mxu0 0.0
  %480 = vmatprep.subr.mxu0 0.0
  %481 = vmatpush1.msra.mxu0 0.0
  %482 = vmatprep.subr.mxu0 0.0
  %483 = vmatpush1.msra.mxu0 0.0
  %484 = vmatprep.subr.mxu0 0.0
  %485 = vmatpush1.msra.mxu0 0.0
  %486 = vmatprep.subr.mxu0 0.0
  %487 = vmatpush1.msra.mxu0 0.0
  %488 = vmatprep.subr.mxu0 0.0
  %489 = vmatpush1.msra.mxu0 0.0
  %490 = vmatprep.subr.mxu0 0.0
  %491 = vmatpush1.msra.mxu0 0.0
  %492 = vmatprep.subr.mxu0 0.0
  %493 = vmatpush1.msra.mxu0 0.0
  %494 = vmatprep.subr.mxu0 0.0
  %495 = vmatpush1.msra.mxu0 %v132
  %496 = vmatprep.subr.mxu0 0.0
  %497 = vmatpush1.msra.mxu0 %v131
  %498 = vmatprep.subr.mxu0 0.0
  %499 = vmatpush1.msra.mxu0 %v130
  %500 = vmatprep.subr.mxu0 0.0
  %501 = vmatpush1.msra.mxu0 %v129
  %502 = vmatprep.subr.mxu0 0.0
  %503 = vmatpush2.msra.mxu0 0.0
  %504 = vmatprep.subr.mxu0 0.0
  %505 = vmatpush2.msra.mxu0 0.0
  %506 = vmatprep.subr.mxu0 0.0
  %507 = vmatpush2.msra.mxu0 0.0
  %508 = vmatprep.subr.mxu0 0.0
  %509 = vmatpush2.msra.mxu0 0.0
  %510 = vmatprep.subr.mxu0 0.0
  %511 = vmatpush2.msra.mxu0 0.0
  %512 = vmatprep.subr.mxu0 0.0
  %513 = vmatpush2.msra.mxu0 0.0
  %514 = vmatprep.subr.mxu0 0.0
  %515 = vmatpush2.msra.mxu0 0.0
  %516 = vmatprep.subr.mxu0 0.0
  %517 = vmatpush2.msra.mxu0 0.0
  %518 = vmatprep.subr.mxu0 0.0
  %519 = vmatpush2.msra.mxu0 0.0
  %520 = vmatprep.subr.mxu0 0.0
  %521 = vmatpush2.msra.mxu0 0.0
  %522 = vmatprep.subr.mxu0 0.0
  %523 = vmatpush2.msra.mxu0 0.0
  %524 = vmatprep.subr.mxu0 0.0
  %525 = vmatpush2.msra.mxu0 0.0
  %526 = vmatprep.subr.mxu0 0.0
  %527 = vmatpush2.msra.mxu0 0.0
  %528 = vmatprep.subr.mxu0 0.0
  %529 = vmatpush2.msra.mxu0 0.0
  %530 = vmatprep.subr.mxu0 0.0
  %531 = vmatpush2.msra.mxu0 0.0
  %532 = vmatprep.subr.mxu0 0.0
  %533 = vmatpush2.msra.mxu0 0.0
  %534 = vmatprep.mubr.f32.mxu0 0.0
  %535 = vmatmul.mubr.f32.gmra.mxu0 %v468
  %v536 = vpop.f32.mrf.mxu0
  %v537 = vadd.f32 0.0, %v536
  %v538 = vpop.f32.mrf.mxu0
  %539 = vdwg.mxu0
  %v541 = vrot.slane %v537, 6
  %v543 = vadd.f32 %v126, %v541
  %v544 = vtanh.pop %v543
  %v546 = vrot.slane %v544, 2
  %v547 = vsel %vm154, %v546, 0
  %549 = vmatprep.subr.mxu0 0.0
  %550 = vmatpush1.msra.mxu0 0.0
  %551 = vmatprep.subr.mxu0 0.0
  %552 = vmatpush1.msra.mxu0 0.0
  %553 = vmatprep.subr.mxu0 0.0
  %554 = vmatpush1.msra.mxu0 0.0
  %555 = vmatprep.subr.mxu0 0.0
  %556 = vmatpush1.msra.mxu0 0.0
  %557 = vmatprep.subr.mxu0 0.0
  %558 = vmatpush1.msra.mxu0 0.0
  %559 = vmatprep.subr.mxu0 0.0
  %560 = vmatpush1.msra.mxu0 0.0
  %561 = vmatprep.subr.mxu0 0.0
  %562 = vmatpush1.msra.mxu0 0.0
  %563 = vmatprep.subr.mxu0 0.0
  %564 = vmatpush1.msra.mxu0 0.0
  %565 = vmatprep.subr.mxu0 0.0
  %566 = vmatpush1.msra.mxu0 0.0
  %567 = vmatprep.subr.mxu0 0.0
  %568 = vmatpush1.msra.mxu0 0.0
  %569 = vmatprep.subr.mxu0 0.0
  %570 = vmatpush1.msra.mxu0 0.0
  %571 = vmatprep.subr.mxu0 0.0
  %572 = vmatpush1.msra.mxu0 0.0
  %573 = vmatprep.subr.mxu0 0.0
  %574 = vmatpush1.msra.mxu0 %v132
  %575 = vmatprep.subr.mxu0 0.0
  %576 = vmatpush1.msra.mxu0 %v131
  %577 = vmatprep.subr.mxu0 0.0
  %578 = vmatpush1.msra.mxu0 %v130
  %579 = vmatprep.subr.mxu0 0.0
  %580 = vmatpush1.msra.mxu0 %v129
  %581 = vmatprep.subr.mxu0 0.0
  %582 = vmatpush2.msra.mxu0 0.0
  %583 = vmatprep.subr.mxu0 0.0
  %584 = vmatpush2.msra.mxu0 0.0
  %585 = vmatprep.subr.mxu0 0.0
  %586 = vmatpush2.msra.mxu0 0.0
  %587 = vmatprep.subr.mxu0 0.0
  %588 = vmatpush2.msra.mxu0 0.0
  %589 = vmatprep.subr.mxu0 0.0
  %590 = vmatpush2.msra.mxu0 0.0
  %591 = vmatprep.subr.mxu0 0.0
  %592 = vmatpush2.msra.mxu0 0.0
  %593 = vmatprep.subr.mxu0 0.0
  %594 = vmatpush2.msra.mxu0 0.0
  %595 = vmatprep.subr.mxu0 0.0
  %596 = vmatpush2.msra.mxu0 0.0
  %597 = vmatprep.subr.mxu0 0.0
  %598 = vmatpush2.msra.mxu0 0.0
  %599 = vmatprep.subr.mxu0 0.0
  %600 = vmatpush2.msra.mxu0 0.0
  %601 = vmatprep.subr.mxu0 0.0
  %602 = vmatpush2.msra.mxu0 0.0
  %603 = vmatprep.subr.mxu0 0.0
  %604 = vmatpush2.msra.mxu0 0.0
  %605 = vmatprep.subr.mxu0 0.0
  %606 = vmatpush2.msra.mxu0 0.0
  %607 = vmatprep.subr.mxu0 0.0
  %608 = vmatpush2.msra.mxu0 0.0
  %609 = vmatprep.subr.mxu0 0.0
  %610 = vmatpush2.msra.mxu0 0.0
  %611 = vmatprep.subr.mxu0 0.0
  %612 = vmatpush2.msra.mxu0 0.0
  %613 = vmatprep.mubr.f32.mxu0 0.0
  %614 = vmatmul.mubr.f32.gmra.mxu0 %v547
  %v615 = vpop.f32.mrf.mxu0
  %v616 = vadd.f32 0.0, %v615
  %v617 = vpop.f32.mrf.mxu0
  %618 = vdwg.mxu0
  %v620 = vrot.slane %v616, 4
  %v622 = vadd.f32 %v126, %v620
  %v623 = vtanh.pop %v622
  %v625 = vrot.slane %v623, 4
  %v626 = vsel %vm154, %v625, 0
  %628 = vmatprep.subr.mxu0 0.0
  %629 = vmatpush1.msra.mxu0 0.0
  %630 = vmatprep.subr.mxu0 0.0
  %631 = vmatpush1.msra.mxu0 0.0
  %632 = vmatprep.subr.mxu0 0.0
  %633 = vmatpush1.msra.mxu0 0.0
  %634 = vmatprep.subr.mxu0 0.0
  %635 = vmatpush1.msra.mxu0 0.0
  %636 = vmatprep.subr.mxu0 0.0
  %637 = vmatpush1.msra.mxu0 0.0
  %638 = vmatprep.subr.mxu0 0.0
  %639 = vmatpush1.msra.mxu0 0.0
  %640 = vmatprep.subr.mxu0 0.0
  %641 = vmatpush1.msra.mxu0 0.0
  %642 = vmatprep.subr.mxu0 0.0
  %643 = vmatpush1.msra.mxu0 0.0
  %644 = vmatprep.subr.mxu0 0.0
  %645 = vmatpush1.msra.mxu0 0.0
  %646 = vmatprep.subr.mxu0 0.0
  %647 = vmatpush1.msra.mxu0 0.0
  %648 = vmatprep.subr.mxu0 0.0
  %649 = vmatpush1.msra.mxu0 0.0
  %650 = vmatprep.subr.mxu0 0.0
  %651 = vmatpush1.msra.mxu0 0.0
  %652 = vmatprep.subr.mxu0 0.0
  %653 = vmatpush1.msra.mxu0 %v132
  %654 = vmatprep.subr.mxu0 0.0
  %655 = vmatpush1.msra.mxu0 %v131
  %656 = vmatprep.subr.mxu0 0.0
  %657 = vmatpush1.msra.mxu0 %v130
  %658 = vmatprep.subr.mxu0 0.0
  %659 = vmatpush1.msra.mxu0 %v129
  %660 = vmatprep.subr.mxu0 0.0
  %661 = vmatpush2.msra.mxu0 0.0
  %662 = vmatprep.subr.mxu0 0.0
  %663 = vmatpush2.msra.mxu0 0.0
  %664 = vmatprep.subr.mxu0 0.0
  %665 = vmatpush2.msra.mxu0 0.0
  %666 = vmatprep.subr.mxu0 0.0
  %667 = vmatpush2.msra.mxu0 0.0
  %668 = vmatprep.subr.mxu0 0.0
  %669 = vmatpush2.msra.mxu0 0.0
  %670 = vmatprep.subr.mxu0 0.0
  %671 = vmatpush2.msra.mxu0 0.0
  %672 = vmatprep.subr.mxu0 0.0
  %673 = vmatpush2.msra.mxu0 0.0
  %674 = vmatprep.subr.mxu0 0.0
  %675 = vmatpush2.msra.mxu0 0.0
  %676 = vmatprep.subr.mxu0 0.0
  %677 = vmatpush2.msra.mxu0 0.0
  %678 = vmatprep.subr.mxu0 0.0
  %679 = vmatpush2.msra.mxu0 0.0
  %680 = vmatprep.subr.mxu0 0.0
  %681 = vmatpush2.msra.mxu0 0.0
  %682 = vmatprep.subr.mxu0 0.0
  %683 = vmatpush2.msra.mxu0 0.0
  %684 = vmatprep.subr.mxu0 0.0
  %685 = vmatpush2.msra.mxu0 0.0
  %686 = vmatprep.subr.mxu0 0.0
  %687 = vmatpush2.msra.mxu0 0.0
  %688 = vmatprep.subr.mxu0 0.0
  %689 = vmatpush2.msra.mxu0 0.0
  %690 = vmatprep.subr.mxu0 0.0
  %691 = vmatpush2.msra.mxu0 0.0
  %692 = vmatprep.mubr.f32.mxu0 0.0
  %693 = vmatmul.mubr.f32.gmra.mxu0 %v626
  %v694 = vpop.f32.mrf.mxu0
  %v695 = vadd.f32 0.0, %v694
  %v696 = vpop.f32.mrf.mxu0
  %697 = vdwg.mxu0
  %v699 = vrot.slane %v695, 2
  %v701 = vadd.f32 %v126, %v699
  %v702 = vtanh.pop %v701
  %v703 = vsel %vm50, %v153, %v232
  %vm704 = vcmask 1043456
  %v705 = vsel %vm704, %v703, %v311
  %vm706 = vcmask 1045504
  %v707 = vsel %vm706, %v705, %v390
  %v708 = vsel %vm50, %v466, %v544
  %v709 = vsel %vm704, %v708, %v623
  %v710 = vsel %vm706, %v709, %v702
  %v711 = vlaneseq
  %v712 = vshrl.u32 %v711, 7
  %v713 = vand.u32 %v23, 1
  %vm714 = vcmp.eq.s32.totalorder %v713, %v712
  %v715 = vshra.s32 %v23, 1
  %716 = vset.pattern.permute.xlu0 1
  %717 = vperm.xlu0 %716, %v20
  %v718 = vpop.permute.xlu0 %717
  %vm719 = vcmp.lt.s32.totalorder %v715, %v718
  %vm720 = vmand %vm714, %vm719
  %v721 = vsel %vm720, 0.0, -1e+09
  %v722 = vadd.s32 %v712, 8
  %v723 = vand.u32 %v712, 1
  %v724 = vand.u32 %v722, 1
  %vm725 = vcmp.eq.s32.totalorder %v713, %v723
  %vm726 = vcmp.eq.s32.totalorder %v713, %v724
  %727 = vset.pattern.permute.xlu0 1
  %728 = vperm.xlu0 %727, %v21
  %v729 = vpop.permute.xlu0 %728
  %vm730 = vcmp.lt.s32.totalorder %v715, %v729
  %vm731 = vmand %vm725, %vm719
  %vm732 = vmand %vm726, %vm730
  %v733 = vsel %vm731, 0.0, -1e+09
  %v734 = vsel %vm732, 0.0, -1e+09
  %v736 = vrot.slane %v702, 6
  %v737 = vsel %vm154, %v736, 0
  %739 = vmatprep.subr.mxu0 0.0
  %740 = vmatpush1.msra.mxu0 0.0
  %741 = vmatprep.subr.mxu0 0.0
  %742 = vmatpush1.msra.mxu0 0.0
  %743 = vmatprep.subr.mxu0 0.0
  %744 = vmatpush1.msra.mxu0 0.0
  %745 = vmatprep.subr.mxu0 0.0
  %746 = vmatpush1.msra.mxu0 0.0
  %747 = vmatprep.subr.mxu0 0.0
  %748 = vmatpush1.msra.mxu0 0.0
  %749 = vmatprep.subr.mxu0 0.0
  %750 = vmatpush1.msra.mxu0 0.0
  %751 = vmatprep.subr.mxu0 0.0
  %752 = vmatpush1.msra.mxu0 0.0
  %753 = vmatprep.subr.mxu0 0.0
  %754 = vmatpush1.msra.mxu0 0.0
  %755 = vmatprep.subr.mxu0 0.0
  %756 = vmatpush1.msra.mxu0 0.0
  %757 = vmatprep.subr.mxu0 0.0
  %758 = vmatpush1.msra.mxu0 0.0
  %759 = vmatprep.subr.mxu0 0.0
  %760 = vmatpush1.msra.mxu0 0.0
  %761 = vmatprep.subr.mxu0 0.0
  %762 = vmatpush1.msra.mxu0 0.0
  %763 = vmatprep.subr.mxu0 0.0
  %764 = vmatpush1.msra.mxu0 %v136
  %765 = vmatprep.subr.mxu0 0.0
  %766 = vmatpush1.msra.mxu0 %v135
  %767 = vmatprep.subr.mxu0 0.0
  %768 = vmatpush1.msra.mxu0 %v134
  %769 = vmatprep.subr.mxu0 0.0
  %770 = vmatpush1.msra.mxu0 %v133
  %771 = vmatprep.subr.mxu0 0.0
  %772 = vmatpush2.msra.mxu0 0.0
  %773 = vmatprep.subr.mxu0 0.0
  %774 = vmatpush2.msra.mxu0 0.0
  %775 = vmatprep.subr.mxu0 0.0
  %776 = vmatpush2.msra.mxu0 0.0
  %777 = vmatprep.subr.mxu0 0.0
  %778 = vmatpush2.msra.mxu0 0.0
  %779 = vmatprep.subr.mxu0 0.0
  %780 = vmatpush2.msra.mxu0 0.0
  %781 = vmatprep.subr.mxu0 0.0
  %782 = vmatpush2.msra.mxu0 0.0
  %783 = vmatprep.subr.mxu0 0.0
  %784 = vmatpush2.msra.mxu0 0.0
  %785 = vmatprep.subr.mxu0 0.0
  %786 = vmatpush2.msra.mxu0 0.0
  %787 = vmatprep.subr.mxu0 0.0
  %788 = vmatpush2.msra.mxu0 0.0
  %789 = vmatprep.subr.mxu0 0.0
  %790 = vmatpush2.msra.mxu0 0.0
  %791 = vmatprep.subr.mxu0 0.0
  %792 = vmatpush2.msra.mxu0 0.0
  %793 = vmatprep.subr.mxu0 0.0
  %794 = vmatpush2.msra.mxu0 0.0
  %795 = vmatprep.subr.mxu0 0.0
  %796 = vmatpush2.msra.mxu0 0.0
  %797 = vmatprep.subr.mxu0 0.0
  %798 = vmatpush2.msra.mxu0 0.0
  %799 = vmatprep.subr.mxu0 0.0
  %800 = vmatpush2.msra.mxu0 0.0
  %801 = vmatprep.subr.mxu0 0.0
  %802 = vmatpush2.msra.mxu0 0.0
  %803 = vmatprep.mubr.f32.mxu0 0.0
  %804 = vmatmul.mubr.f32.gmra.mxu0 %v737
  %v805 = vpop.f32.mrf.mxu0
  %v806 = vadd.f32 0.0, %v805
  %v807 = vpop.f32.mrf.mxu0
  %808 = vdwg.mxu0
  %v810 = vsel %vm154, %v806, 0
  %v813 = vsel %vm154, %v707, 0
  %v816 = vsel %vm154, %v710, 0
  %818 = vmatprep.subr.mxu0 0.0
  %819 = vmatpush1.xpose.msra.mxu0 0.0
  %820 = vmatprep.subr.mxu0 0.0
  %821 = vmatpush1.xpose.msra.mxu0 0.0
  %822 = vmatprep.subr.mxu0 0.0
  %823 = vmatpush1.xpose.msra.mxu0 0.0
  %824 = vmatprep.subr.mxu0 0.0
  %825 = vmatpush1.xpose.msra.mxu0 0.0
  %826 = vmatprep.subr.mxu0 0.0
  %827 = vmatpush1.xpose.msra.mxu0 0.0
  %828 = vmatprep.subr.mxu0 0.0
  %829 = vmatpush1.xpose.msra.mxu0 0.0
  %830 = vmatprep.subr.mxu0 0.0
  %831 = vmatpush1.xpose.msra.mxu0 0.0
  %832 = vmatprep.subr.mxu0 0.0
  %833 = vmatpush1.xpose.msra.mxu0 0.0
  %834 = vmatprep.subr.mxu0 0.0
  %835 = vmatpush1.xpose.msra.mxu0 0.0
  %836 = vmatprep.subr.mxu0 0.0
  %837 = vmatpush1.xpose.msra.mxu0 0.0
  %838 = vmatprep.subr.mxu0 0.0
  %839 = vmatpush1.xpose.msra.mxu0 0.0
  %840 = vmatprep.subr.mxu0 0.0
  %841 = vmatpush1.xpose.msra.mxu0 0.0
  %842 = vmatprep.subr.mxu0 0.0
  %843 = vmatpush1.xpose.msra.mxu0 0.0
  %844 = vmatprep.subr.mxu0 0.0
  %845 = vmatpush1.xpose.msra.mxu0 0.0
  %846 = vmatprep.subr.mxu0 0.0
  %847 = vmatpush1.xpose.msra.mxu0 %v816
  %848 = vmatprep.subr.mxu0 0.0
  %849 = vmatpush1.xpose.msra.mxu0 %v813
  %850 = vmatprep.subr.mxu0 0.0
  %851 = vmatpush2.xpose.msra.mxu0 0.0
  %852 = vmatprep.subr.mxu0 0.0
  %853 = vmatpush2.xpose.msra.mxu0 0.0
  %854 = vmatprep.subr.mxu0 0.0
  %855 = vmatpush2.xpose.msra.mxu0 0.0
  %856 = vmatprep.subr.mxu0 0.0
  %857 = vmatpush2.xpose.msra.mxu0 0.0
  %858 = vmatprep.subr.mxu0 0.0
  %859 = vmatpush2.xpose.msra.mxu0 0.0
  %860 = vmatprep.subr.mxu0 0.0
  %861 = vmatpush2.xpose.msra.mxu0 0.0
  %862 = vmatprep.subr.mxu0 0.0
  %863 = vmatpush2.xpose.msra.mxu0 0.0
  %864 = vmatprep.subr.mxu0 0.0
  %865 = vmatpush2.xpose.msra.mxu0 0.0
  %866 = vmatprep.subr.mxu0 0.0
  %867 = vmatpush2.xpose.msra.mxu0 0.0
  %868 = vmatprep.subr.mxu0 0.0
  %869 = vmatpush2.xpose.msra.mxu0 0.0
  %870 = vmatprep.subr.mxu0 0.0
  %871 = vmatpush2.xpose.msra.mxu0 0.0
  %872 = vmatprep.subr.mxu0 0.0
  %873 = vmatpush2.xpose.msra.mxu0 0.0
  %874 = vmatprep.subr.mxu0 0.0
  %875 = vmatpush2.xpose.msra.mxu0 0.0
  %876 = vmatprep.subr.mxu0 0.0
  %877 = vmatpush2.xpose.msra.mxu0 0.0
  %878 = vmatprep.subr.mxu0 0.0
  %879 = vmatpush2.xpose.msra.mxu0 0.0
  %880 = vmatprep.subr.mxu0 0.0
  %881 = vmatpush2.xpose.msra.mxu0 0.0
  %882 = vmatprep.mubr.f32.mxu0 0.0
  %883 = vmatmul.mubr.f32.gmra.mxu0 %v810
  %v884 = vpop.f32.mrf.mxu0
  %v885 = vadd.f32 %v721, %v884
  %v886 = vpop.f32.mrf.mxu0
  %887 = vdwg.mxu0
  %vm888 = vcmask 123904
  %v889 = vsel %vm888, %v885, -inf
  %890 = vmax.xlane.f32.xlu0 %v889
  %v891 = vpop.xlane.xlu0 %890
  %v892 = vsub.f32 %v885, %v891
  %v893 = vmul.f32 %v892, 1.442695
  %v894 = vpow.pop %v893
  %v895 = vsel %vm888, %v894, 0.0
  %896 = vadd.xlane.f32.xlu0 %v895
  %v897 = vpop.xlane.xlu0 %896
  %v898 = vrcp.pop %v897
  %v899 = vmul.f32 %v894, %v898
  %vm900 = vcmask 130048
  %v902 = vsel %vm900, %v899, 0
  %904 = vmatprep.subr.mxu0 0.0
  %905 = vmatpush1.msra.mxu0 0.0
  %906 = vmatprep.subr.mxu0 0.0
  %907 = vmatpush1.msra.mxu0 0.0
  %908 = vmatprep.subr.mxu0 0.0
  %909 = vmatpush1.msra.mxu0 0.0
  %910 = vmatprep.subr.mxu0 0.0
  %911 = vmatpush1.msra.mxu0 0.0
  %912 = vmatprep.subr.mxu0 0.0
  %913 = vmatpush1.msra.mxu0 0.0
  %914 = vmatprep.subr.mxu0 0.0
  %915 = vmatpush1.msra.mxu0 0.0
  %916 = vmatprep.subr.mxu0 0.0
  %917 = vmatpush1.msra.mxu0 0.0
  %918 = vmatprep.subr.mxu0 0.0
  %919 = vmatpush1.msra.mxu0 0.0
  %920 = vmatprep.subr.mxu0 0.0
  %921 = vmatpush1.msra.mxu0 0.0
  %922 = vmatprep.subr.mxu0 0.0
  %923 = vmatpush1.msra.mxu0 0.0
  %924 = vmatprep.subr.mxu0 0.0
  %925 = vmatpush1.msra.mxu0 0.0
  %926 = vmatprep.subr.mxu0 0.0
  %927 = vmatpush1.msra.mxu0 0.0
  %928 = vmatprep.subr.mxu0 0.0
  %929 = vmatpush1.msra.mxu0 0.0
  %930 = vmatprep.subr.mxu0 0.0
  %931 = vmatpush1.msra.mxu0 0.0
  %932 = vmatprep.subr.mxu0 0.0
  %933 = vmatpush1.msra.mxu0 %v710
  %934 = vmatprep.subr.mxu0 0.0
  %935 = vmatpush1.msra.mxu0 %v707
  %936 = vmatprep.subr.mxu0 0.0
  %937 = vmatpush2.msra.mxu0 0.0
  %938 = vmatprep.subr.mxu0 0.0
  %939 = vmatpush2.msra.mxu0 0.0
  %940 = vmatprep.subr.mxu0 0.0
  %941 = vmatpush2.msra.mxu0 0.0
  %942 = vmatprep.subr.mxu0 0.0
  %943 = vmatpush2.msra.mxu0 0.0
  %944 = vmatprep.subr.mxu0 0.0
  %945 = vmatpush2.msra.mxu0 0.0
  %946 = vmatprep.subr.mxu0 0.0
  %947 = vmatpush2.msra.mxu0 0.0
  %948 = vmatprep.subr.mxu0 0.0
  %949 = vmatpush2.msra.mxu0 0.0
  %950 = vmatprep.subr.mxu0 0.0
  %951 = vmatpush2.msra.mxu0 0.0
  %952 = vmatprep.subr.mxu0 0.0
  %953 = vmatpush2.msra.mxu0 0.0
  %954 = vmatprep.subr.mxu0 0.0
  %955 = vmatpush2.msra.mxu0 0.0
  %956 = vmatprep.subr.mxu0 0.0
  %957 = vmatpush2.msra.mxu0 0.0
  %958 = vmatprep.subr.mxu0 0.0
  %959 = vmatpush2.msra.mxu0 0.0
  %960 = vmatprep.subr.mxu0 0.0
  %961 = vmatpush2.msra.mxu0 0.0
  %962 = vmatprep.subr.mxu0 0.0
  %963 = vmatpush2.msra.mxu0 0.0
  %964 = vmatprep.subr.mxu0 0.0
  %965 = vmatpush2.msra.mxu0 0.0
  %966 = vmatprep.subr.mxu0 0.0
  %967 = vmatpush2.msra.mxu0 0.0
  %968 = vmatprep.mubr.f32.mxu0 0.0
  %969 = vmatmul.mubr.f32.gmra.mxu0 %v902
  %v970 = vpop.f32.mrf.mxu0
  %v971 = vadd.f32 0.0, %v970
  %v972 = vpop.f32.mrf.mxu0
  %973 = vdwg.mxu0
  %v975 = vrot.slane %v971, 2
  %976 = vrot.lane.b32.xlu0 %v975, 32
  %v977 = vpop.permute.xlu0 %976
  %v979 = vsel %vm154, %v702, %v977
  %v980 = vld [vmem:[%s3] sm:$0xff]
  %v981 = vld [vmem:[%s3 + $0x8] sm:$0xff]
  %v982 = vld [vmem:[%s3 + $0x10] sm:$0xff]
  %v983 = vld [vmem:[%s3 + $0x18] sm:$0xff]
  %v984 = vld [vmem:[%s3 + $0x20] sm:$0xff]
  %v985 = vld [vmem:[%s3 + $0x28] sm:$0xff]
  %v986 = vld [vmem:[%s3 + $0x30] sm:$0xff]
  %v987 = vld [vmem:[%s3 + $0x38] sm:$0xff]
  %v988 = vld [vmem:[%s4] sm:$0x1]
  %v989 = vlaneseq
  %v990 = vshrl.u32 %v989, 7
  %v991 = vsub.s32 0, %v990
  %v992 = vrot.slane %v988, %v991
  %v994 = vrot.slane %v979, 6
  %vm995 = vcmask 523264
  %v996 = vsel %vm995, %v994, 0
  %998 = vmatprep.subr.mxu0 0.0
  %999 = vmatpush1.msra.mxu0 0.0
  %1000 = vmatprep.subr.mxu0 0.0
  %1001 = vmatpush1.msra.mxu0 0.0
  %1002 = vmatprep.subr.mxu0 0.0
  %1003 = vmatpush1.msra.mxu0 0.0
  %1004 = vmatprep.subr.mxu0 0.0
  %1005 = vmatpush1.msra.mxu0 0.0
  %1006 = vmatprep.subr.mxu0 0.0
  %1007 = vmatpush1.msra.mxu0 0.0
  %1008 = vmatprep.subr.mxu0 0.0
  %1009 = vmatpush1.msra.mxu0 0.0
  %1010 = vmatprep.subr.mxu0 0.0
  %1011 = vmatpush1.msra.mxu0 0.0
  %1012 = vmatprep.subr.mxu0 0.0
  %1013 = vmatpush1.msra.mxu0 0.0
  %1014 = vmatprep.subr.mxu0 0.0
  %1015 = vmatpush1.msra.mxu0 %v987
  %1016 = vmatprep.subr.mxu0 0.0
  %1017 = vmatpush1.msra.mxu0 %v986
  %1018 = vmatprep.subr.mxu0 0.0
  %1019 = vmatpush1.msra.mxu0 %v985
  %1020 = vmatprep.subr.mxu0 0.0
  %1021 = vmatpush1.msra.mxu0 %v984
  %1022 = vmatprep.subr.mxu0 0.0
  %1023 = vmatpush1.msra.mxu0 %v983
  %1024 = vmatprep.subr.mxu0 0.0
  %1025 = vmatpush1.msra.mxu0 %v982
  %1026 = vmatprep.subr.mxu0 0.0
  %1027 = vmatpush1.msra.mxu0 %v981
  %1028 = vmatprep.subr.mxu0 0.0
  %1029 = vmatpush1.msra.mxu0 %v980
  %1030 = vmatprep.subr.mxu0 0.0
  %1031 = vmatpush2.msra.mxu0 0.0
  %1032 = vmatprep.subr.mxu0 0.0
  %1033 = vmatpush2.msra.mxu0 0.0
  %1034 = vmatprep.subr.mxu0 0.0
  %1035 = vmatpush2.msra.mxu0 0.0
  %1036 = vmatprep.subr.mxu0 0.0
  %1037 = vmatpush2.msra.mxu0 0.0
  %1038 = vmatprep.subr.mxu0 0.0
  %1039 = vmatpush2.msra.mxu0 0.0
  %1040 = vmatprep.subr.mxu0 0.0
  %1041 = vmatpush2.msra.mxu0 0.0
  %1042 = vmatprep.subr.mxu0 0.0
  %1043 = vmatpush2.msra.mxu0 0.0
  %1044 = vmatprep.subr.mxu0 0.0
  %1045 = vmatpush2.msra.mxu0 0.0
  %1046 = vmatprep.subr.mxu0 0.0
  %1047 = vmatpush2.msra.mxu0 0.0
  %1048 = vmatprep.subr.mxu0 0.0
  %1049 = vmatpush2.msra.mxu0 0.0
  %1050 = vmatprep.subr.mxu0 0.0
  %1051 = vmatpush2.msra.mxu0 0.0
  %1052 = vmatprep.subr.mxu0 0.0
  %1053 = vmatpush2.msra.mxu0 0.0
  %1054 = vmatprep.subr.mxu0 0.0
  %1055 = vmatpush2.msra.mxu0 0.0
  %1056 = vmatprep.subr.mxu0 0.0
  %1057 = vmatpush2.msra.mxu0 0.0
  %1058 = vmatprep.subr.mxu0 0.0
  %1059 = vmatpush2.msra.mxu0 0.0
  %1060 = vmatprep.subr.mxu0 0.0
  %1061 = vmatpush2.msra.mxu0 0.0
  %1062 = vmatprep.mubr.f32.mxu0 0.0
  %1063 = vmatmul.mubr.f32.gmra.mxu0 %v996
  %v1064 = vpop.f32.mrf.mxu0
  %v1065 = vadd.f32 %v992, %v1064
  %v1066 = vpop.f32.mrf.mxu0
  %1067 = vdwg.mxu0
  %v1068 = vsel %vm154, %v971, 0
  %1070 = vmatprep.subr.mxu0 0.0
  %1071 = vmatpush1.msra.mxu0 0.0
  %1072 = vmatprep.subr.mxu0 0.0
  %1073 = vmatpush1.msra.mxu0 0.0
  %1074 = vmatprep.subr.mxu0 0.0
  %1075 = vmatpush1.msra.mxu0 0.0
  %1076 = vmatprep.subr.mxu0 0.0
  %1077 = vmatpush1.msra.mxu0 0.0
  %1078 = vmatprep.subr.mxu0 0.0
  %1079 = vmatpush1.msra.mxu0 0.0
  %1080 = vmatprep.subr.mxu0 0.0
  %1081 = vmatpush1.msra.mxu0 0.0
  %1082 = vmatprep.subr.mxu0 0.0
  %1083 = vmatpush1.msra.mxu0 0.0
  %1084 = vmatprep.subr.mxu0 0.0
  %1085 = vmatpush1.msra.mxu0 0.0
  %1086 = vmatprep.subr.mxu0 0.0
  %1087 = vmatpush1.msra.mxu0 0.0
  %1088 = vmatprep.subr.mxu0 0.0
  %1089 = vmatpush1.msra.mxu0 0.0
  %1090 = vmatprep.subr.mxu0 0.0
  %1091 = vmatpush1.msra.mxu0 0.0
  %1092 = vmatprep.subr.mxu0 0.0
  %1093 = vmatpush1.msra.mxu0 0.0
  %1094 = vmatprep.subr.mxu0 0.0
  %1095 = vmatpush1.msra.mxu0 %v140
  %1096 = vmatprep.subr.mxu0 0.0
  %1097 = vmatpush1.msra.mxu0 %v139
  %1098 = vmatprep.subr.mxu0 0.0
  %1099 = vmatpush1.msra.mxu0 %v138
  %1100 = vmatprep.subr.mxu0 0.0
  %1101 = vmatpush1.msra.mxu0 %v137
  %1102 = vmatprep.subr.mxu0 0.0
  %1103 = vmatpush2.msra.mxu0 0.0
  %1104 = vmatprep.subr.mxu0 0.0
  %1105 = vmatpush2.msra.mxu0 0.0
  %1106 = vmatprep.subr.mxu0 0.0
  %1107 = vmatpush2.msra.mxu0 0.0
  %1108 = vmatprep.subr.mxu0 0.0
  %1109 = vmatpush2.msra.mxu0 0.0
  %1110 = vmatprep.subr.mxu0 0.0
  %1111 = vmatpush2.msra.mxu0 0.0
  %1112 = vmatprep.subr.mxu0 0.0
  %1113 = vmatpush2.msra.mxu0 0.0
  %1114 = vmatprep.subr.mxu0 0.0
  %1115 = vmatpush2.msra.mxu0 0.0
  %1116 = vmatprep.subr.mxu0 0.0
  %1117 = vmatpush2.msra.mxu0 0.0
  %1118 = vmatprep.subr.mxu0 0.0
  %1119 = vmatpush2.msra.mxu0 0.0
  %1120 = vmatprep.subr.mxu0 0.0
  %1121 = vmatpush2.msra.mxu0 0.0
  %1122 = vmatprep.subr.mxu0 0.0
  %1123 = vmatpush2.msra.mxu0 0.0
  %1124 = vmatprep.subr.mxu0 0.0
  %1125 = vmatpush2.msra.mxu0 0.0
  %1126 = vmatprep.subr.mxu0 0.0
  %1127 = vmatpush2.msra.mxu0 0.0
  %1128 = vmatprep.subr.mxu0 0.0
  %1129 = vmatpush2.msra.mxu0 0.0
  %1130 = vmatprep.subr.mxu0 0.0
  %1131 = vmatpush2.msra.mxu0 0.0
  %1132 = vmatprep.subr.mxu0 0.0
  %1133 = vmatpush2.msra.mxu0 0.0
  %1134 = vmatprep.mubr.f32.mxu0 0.0
  %1135 = vmatmul.mubr.f32.gmra.mxu0 %v1068
  %v1136 = vpop.f32.mrf.mxu0
  %v1137 = vadd.f32 0.0, %v1136
  %v1138 = vpop.f32.mrf.mxu0
  %1139 = vdwg.mxu0
  %v1141 = vrot.slane %v1137, 2
  %v1143 = vadd.f32 %v702, %v1141
  %v1145 = vrot.slane %v1143, 6
  %v1146 = vsel %vm154, %v1145, 0
  %1148 = vmatprep.subr.mxu0 0.0
  %1149 = vmatpush1.msra.mxu0 0.0
  %1150 = vmatprep.subr.mxu0 0.0
  %1151 = vmatpush1.msra.mxu0 0.0
  %1152 = vmatprep.subr.mxu0 0.0
  %1153 = vmatpush1.msra.mxu0 0.0
  %1154 = vmatprep.subr.mxu0 0.0
  %1155 = vmatpush1.msra.mxu0 0.0
  %1156 = vmatprep.subr.mxu0 0.0
  %1157 = vmatpush1.msra.mxu0 0.0
  %1158 = vmatprep.subr.mxu0 0.0
  %1159 = vmatpush1.msra.mxu0 0.0
  %1160 = vmatprep.subr.mxu0 0.0
  %1161 = vmatpush1.msra.mxu0 0.0
  %1162 = vmatprep.subr.mxu0 0.0
  %1163 = vmatpush1.msra.mxu0 0.0
  %1164 = vmatprep.subr.mxu0 0.0
  %1165 = vmatpush1.msra.mxu0 0.0
  %1166 = vmatprep.subr.mxu0 0.0
  %1167 = vmatpush1.msra.mxu0 0.0
  %1168 = vmatprep.subr.mxu0 0.0
  %1169 = vmatpush1.msra.mxu0 0.0
  %1170 = vmatprep.subr.mxu0 0.0
  %1171 = vmatpush1.msra.mxu0 0.0
  %1172 = vmatprep.subr.mxu0 0.0
  %1173 = vmatpush1.msra.mxu0 %v144
  %1174 = vmatprep.subr.mxu0 0.0
  %1175 = vmatpush1.msra.mxu0 %v143
  %1176 = vmatprep.subr.mxu0 0.0
  %1177 = vmatpush1.msra.mxu0 %v142
  %1178 = vmatprep.subr.mxu0 0.0
  %1179 = vmatpush1.msra.mxu0 %v141
  %1180 = vmatprep.subr.mxu0 0.0
  %1181 = vmatpush2.msra.mxu0 0.0
  %1182 = vmatprep.subr.mxu0 0.0
  %1183 = vmatpush2.msra.mxu0 0.0
  %1184 = vmatprep.subr.mxu0 0.0
  %1185 = vmatpush2.msra.mxu0 0.0
  %1186 = vmatprep.subr.mxu0 0.0
  %1187 = vmatpush2.msra.mxu0 0.0
  %1188 = vmatprep.subr.mxu0 0.0
  %1189 = vmatpush2.msra.mxu0 0.0
  %1190 = vmatprep.subr.mxu0 0.0
  %1191 = vmatpush2.msra.mxu0 0.0
  %1192 = vmatprep.subr.mxu0 0.0
  %1193 = vmatpush2.msra.mxu0 0.0
  %1194 = vmatprep.subr.mxu0 0.0
  %1195 = vmatpush2.msra.mxu0 0.0
  %1196 = vmatprep.subr.mxu0 0.0
  %1197 = vmatpush2.msra.mxu0 0.0
  %1198 = vmatprep.subr.mxu0 0.0
  %1199 = vmatpush2.msra.mxu0 0.0
  %1200 = vmatprep.subr.mxu0 0.0
  %1201 = vmatpush2.msra.mxu0 0.0
  %1202 = vmatprep.subr.mxu0 0.0
  %1203 = vmatpush2.msra.mxu0 0.0
  %1204 = vmatprep.subr.mxu0 0.0
  %1205 = vmatpush2.msra.mxu0 0.0
  %1206 = vmatprep.subr.mxu0 0.0
  %1207 = vmatpush2.msra.mxu0 0.0
  %1208 = vmatprep.subr.mxu0 0.0
  %1209 = vmatpush2.msra.mxu0 0.0
  %1210 = vmatprep.subr.mxu0 0.0
  %1211 = vmatpush2.msra.mxu0 0.0
  %1212 = vmatprep.mubr.f32.mxu0 0.0
  %1213 = vmatmul.mubr.f32.gmra.mxu0 %v1146
  %v1214 = vpop.f32.mrf.mxu0
  %v1215 = vadd.f32 0.0, %v1214
  %v1216 = vpop.f32.mrf.mxu0
  %1217 = vdwg.mxu0
  %v1219 = vsel %vm154, %v1215, 0
  %1221 = vmatprep.subr.mxu0 0.0
  %1222 = vmatpush1.xpose.msra.mxu0 0.0
  %1223 = vmatprep.subr.mxu0 0.0
  %1224 = vmatpush1.xpose.msra.mxu0 0.0
  %1225 = vmatprep.subr.mxu0 0.0
  %1226 = vmatpush1.xpose.msra.mxu0 0.0
  %1227 = vmatprep.subr.mxu0 0.0
  %1228 = vmatpush1.xpose.msra.mxu0 0.0
  %1229 = vmatprep.subr.mxu0 0.0
  %1230 = vmatpush1.xpose.msra.mxu0 0.0
  %1231 = vmatprep.subr.mxu0 0.0
  %1232 = vmatpush1.xpose.msra.mxu0 0.0
  %1233 = vmatprep.subr.mxu0 0.0
  %1234 = vmatpush1.xpose.msra.mxu0 0.0
  %1235 = vmatprep.subr.mxu0 0.0
  %1236 = vmatpush1.xpose.msra.mxu0 0.0
  %1237 = vmatprep.subr.mxu0 0.0
  %1238 = vmatpush1.xpose.msra.mxu0 0.0
  %1239 = vmatprep.subr.mxu0 0.0
  %1240 = vmatpush1.xpose.msra.mxu0 0.0
  %1241 = vmatprep.subr.mxu0 0.0
  %1242 = vmatpush1.xpose.msra.mxu0 0.0
  %1243 = vmatprep.subr.mxu0 0.0
  %1244 = vmatpush1.xpose.msra.mxu0 0.0
  %1245 = vmatprep.subr.mxu0 0.0
  %1246 = vmatpush1.xpose.msra.mxu0 0.0
  %1247 = vmatprep.subr.mxu0 0.0
  %1248 = vmatpush1.xpose.msra.mxu0 0.0
  %1249 = vmatprep.subr.mxu0 0.0
  %1250 = vmatpush1.xpose.msra.mxu0 %v816
  %1251 = vmatprep.subr.mxu0 0.0
  %1252 = vmatpush1.xpose.msra.mxu0 %v813
  %1253 = vmatprep.subr.mxu0 0.0
  %1254 = vmatpush2.xpose.msra.mxu0 0.0
  %1255 = vmatprep.subr.mxu0 0.0
  %1256 = vmatpush2.xpose.msra.mxu0 0.0
  %1257 = vmatprep.subr.mxu0 0.0
  %1258 = vmatpush2.xpose.msra.mxu0 0.0
  %1259 = vmatprep.subr.mxu0 0.0
  %1260 = vmatpush2.xpose.msra.mxu0 0.0
  %1261 = vmatprep.subr.mxu0 0.0
  %1262 = vmatpush2.xpose.msra.mxu0 0.0
  %1263 = vmatprep.subr.mxu0 0.0
  %1264 = vmatpush2.xpose.msra.mxu0 0.0
  %1265 = vmatprep.subr.mxu0 0.0
  %1266 = vmatpush2.xpose.msra.mxu0 0.0
  %1267 = vmatprep.subr.mxu0 0.0
  %1268 = vmatpush2.xpose.msra.mxu0 0.0
  %1269 = vmatprep.subr.mxu0 0.0
  %1270 = vmatpush2.xpose.msra.mxu0 0.0
  %1271 = vmatprep.subr.mxu0 0.0
  %1272 = vmatpush2.xpose.msra.mxu0 0.0
  %1273 = vmatprep.subr.mxu0 0.0
  %1274 = vmatpush2.xpose.msra.mxu0 0.0
  %1275 = vmatprep.subr.mxu0 0.0
  %1276 = vmatpush2.xpose.msra.mxu0 0.0
  %1277 = vmatprep.subr.mxu0 0.0
  %1278 = vmatpush2.xpose.msra.mxu0 0.0
  %1279 = vmatprep.subr.mxu0 0.0
  %1280 = vmatpush2.xpose.msra.mxu0 0.0
  %1281 = vmatprep.subr.mxu0 0.0
  %1282 = vmatpush2.xpose.msra.mxu0 0.0
  %1283 = vmatprep.subr.mxu0 0.0
  %1284 = vmatpush2.xpose.msra.mxu0 0.0
  %1285 = vmatprep.mubr.f32.mxu0 0.0
  %1286 = vmatmul.mubr.f32.gmra.mxu0 %v1219
  %v1287 = vpop.f32.mrf.mxu0
  %v1288 = vadd.f32 %v721, %v1287
  %v1289 = vpop.f32.mrf.mxu0
  %1290 = vdwg.mxu0
  %v1291 = vsel %vm888, %v1288, -inf
  %1292 = vmax.xlane.f32.xlu0 %v1291
  %v1293 = vpop.xlane.xlu0 %1292
  %v1294 = vsub.f32 %v1288, %v1293
  %v1295 = vmul.f32 %v1294, 1.442695
  %v1296 = vpow.pop %v1295
  %v1297 = vsel %vm888, %v1296, 0.0
  %1298 = vadd.xlane.f32.xlu0 %v1297
  %v1299 = vpop.xlane.xlu0 %1298
  %v1300 = vrcp.pop %v1299
  %v1301 = vmul.f32 %v1296, %v1300
  %v1303 = vsel %vm900, %v1301, 0
  %1305 = vmatprep.subr.mxu0 0.0
  %1306 = vmatpush1.msra.mxu0 0.0
  %1307 = vmatprep.subr.mxu0 0.0
  %1308 = vmatpush1.msra.mxu0 0.0
  %1309 = vmatprep.subr.mxu0 0.0
  %1310 = vmatpush1.msra.mxu0 0.0
  %1311 = vmatprep.subr.mxu0 0.0
  %1312 = vmatpush1.msra.mxu0 0.0
  %1313 = vmatprep.subr.mxu0 0.0
  %1314 = vmatpush1.msra.mxu0 0.0
  %1315 = vmatprep.subr.mxu0 0.0
  %1316 = vmatpush1.msra.mxu0 0.0
  %1317 = vmatprep.subr.mxu0 0.0
  %1318 = vmatpush1.msra.mxu0 0.0
  %1319 = vmatprep.subr.mxu0 0.0
  %1320 = vmatpush1.msra.mxu0 0.0
  %1321 = vmatprep.subr.mxu0 0.0
  %1322 = vmatpush1.msra.mxu0 0.0
  %1323 = vmatprep.subr.mxu0 0.0
  %1324 = vmatpush1.msra.mxu0 0.0
  %1325 = vmatprep.subr.mxu0 0.0
  %1326 = vmatpush1.msra.mxu0 0.0
  %1327 = vmatprep.subr.mxu0 0.0
  %1328 = vmatpush1.msra.mxu0 0.0
  %1329 = vmatprep.subr.mxu0 0.0
  %1330 = vmatpush1.msra.mxu0 0.0
  %1331 = vmatprep.subr.mxu0 0.0
  %1332 = vmatpush1.msra.mxu0 0.0
  %1333 = vmatprep.subr.mxu0 0.0
  %1334 = vmatpush1.msra.mxu0 %v710
  %1335 = vmatprep.subr.mxu0 0.0
  %1336 = vmatpush1.msra.mxu0 %v707
  %1337 = vmatprep.subr.mxu0 0.0
  %1338 = vmatpush2.msra.mxu0 0.0
  %1339 = vmatprep.subr.mxu0 0.0
  %1340 = vmatpush2.msra.mxu0 0.0
  %1341 = vmatprep.subr.mxu0 0.0
  %1342 = vmatpush2.msra.mxu0 0.0
  %1343 = vmatprep.subr.mxu0 0.0
  %1344 = vmatpush2.msra.mxu0 0.0
  %1345 = vmatprep.subr.mxu0 0.0
  %1346 = vmatpush2.msra.mxu0 0.0
  %1347 = vmatprep.subr.mxu0 0.0
  %1348 = vmatpush2.msra.mxu0 0.0
  %1349 = vmatprep.subr.mxu0 0.0
  %1350 = vmatpush2.msra.mxu0 0.0
  %1351 = vmatprep.subr.mxu0 0.0
  %1352 = vmatpush2.msra.mxu0 0.0
  %1353 = vmatprep.subr.mxu0 0.0
  %1354 = vmatpush2.msra.mxu0 0.0
  %1355 = vmatprep.subr.mxu0 0.0
  %1356 = vmatpush2.msra.mxu0 0.0
  %1357 = vmatprep.subr.mxu0 0.0
  %1358 = vmatpush2.msra.mxu0 0.0
  %1359 = vmatprep.subr.mxu0 0.0
  %1360 = vmatpush2.msra.mxu0 0.0
  %1361 = vmatprep.subr.mxu0 0.0
  %1362 = vmatpush2.msra.mxu0 0.0
  %1363 = vmatprep.subr.mxu0 0.0
  %1364 = vmatpush2.msra.mxu0 0.0
  %1365 = vmatprep.subr.mxu0 0.0
  %1366 = vmatpush2.msra.mxu0 0.0
  %1367 = vmatprep.subr.mxu0 0.0
  %1368 = vmatpush2.msra.mxu0 0.0
  %1369 = vmatprep.mubr.f32.mxu0 0.0
  %1370 = vmatmul.mubr.f32.gmra.mxu0 %v1303
  %v1371 = vpop.f32.mrf.mxu0
  %v1372 = vadd.f32 0.0, %v1371
  %v1373 = vpop.f32.mrf.mxu0
  %1374 = vdwg.mxu0
  %v1376 = vrot.slane %v1372, 2
  %1377 = vrot.lane.b32.xlu0 %v1376, 32
  %v1378 = vpop.permute.xlu0 %1377
  %v1380 = vsel %vm154, %v1143, %v1378
  %v1381 = vld [vmem:[%s3 + $0x40] sm:$0xff]
  %v1382 = vld [vmem:[%s3 + $0x48] sm:$0xff]
  %v1383 = vld [vmem:[%s3 + $0x50] sm:$0xff]
  %v1384 = vld [vmem:[%s3 + $0x58] sm:$0xff]
  %v1385 = vld [vmem:[%s3 + $0x60] sm:$0xff]
  %v1386 = vld [vmem:[%s3 + $0x68] sm:$0xff]
  %v1387 = vld [vmem:[%s3 + $0x70] sm:$0xff]
  %v1388 = vld [vmem:[%s3 + $0x78] sm:$0xff]
  %v1389 = vld [vmem:[%s4 + $0x1] sm:$0x1]
  %v1390 = vlaneseq
  %v1391 = vshrl.u32 %v1390, 7
  %v1392 = vsub.s32 0, %v1391
  %v1393 = vrot.slane %v1389, %v1392
  %v1395 = vrot.slane %v1380, 6
  %v1396 = vsel %vm995, %v1395, 0
  %1398 = vmatprep.subr.mxu0 0.0
  %1399 = vmatpush1.msra.mxu0 0.0
  %1400 = vmatprep.subr.mxu0 0.0
  %1401 = vmatpush1.msra.mxu0 0.0
  %1402 = vmatprep.subr.mxu0 0.0
  %1403 = vmatpush1.msra.mxu0 0.0
  %1404 = vmatprep.subr.mxu0 0.0
  %1405 = vmatpush1.msra.mxu0 0.0
  %1406 = vmatprep.subr.mxu0 0.0
  %1407 = vmatpush1.msra.mxu0 0.0
  %1408 = vmatprep.subr.mxu0 0.0
  %1409 = vmatpush1.msra.mxu0 0.0
  %1410 = vmatprep.subr.mxu0 0.0
  %1411 = vmatpush1.msra.mxu0 0.0
  %1412 = vmatprep.subr.mxu0 0.0
  %1413 = vmatpush1.msra.mxu0 0.0
  %1414 = vmatprep.subr.mxu0 0.0
  %1415 = vmatpush1.msra.mxu0 %v1388
  %1416 = vmatprep.subr.mxu0 0.0
  %1417 = vmatpush1.msra.mxu0 %v1387
  %1418 = vmatprep.subr.mxu0 0.0
  %1419 = vmatpush1.msra.mxu0 %v1386
  %1420 = vmatprep.subr.mxu0 0.0
  %1421 = vmatpush1.msra.mxu0 %v1385
  %1422 = vmatprep.subr.mxu0 0.0
  %1423 = vmatpush1.msra.mxu0 %v1384
  %1424 = vmatprep.subr.mxu0 0.0
  %1425 = vmatpush1.msra.mxu0 %v1383
  %1426 = vmatprep.subr.mxu0 0.0
  %1427 = vmatpush1.msra.mxu0 %v1382
  %1428 = vmatprep.subr.mxu0 0.0
  %1429 = vmatpush1.msra.mxu0 %v1381
  %1430 = vmatprep.subr.mxu0 0.0
  %1431 = vmatpush2.msra.mxu0 0.0
  %1432 = vmatprep.subr.mxu0 0.0
  %1433 = vmatpush2.msra.mxu0 0.0
  %1434 = vmatprep.subr.mxu0 0.0
  %1435 = vmatpush2.msra.mxu0 0.0
  %1436 = vmatprep.subr.mxu0 0.0
  %1437 = vmatpush2.msra.mxu0 0.0
  %1438 = vmatprep.subr.mxu0 0.0
  %1439 = vmatpush2.msra.mxu0 0.0
  %1440 = vmatprep.subr.mxu0 0.0
  %1441 = vmatpush2.msra.mxu0 0.0
  %1442 = vmatprep.subr.mxu0 0.0
  %1443 = vmatpush2.msra.mxu0 0.0
  %1444 = vmatprep.subr.mxu0 0.0
  %1445 = vmatpush2.msra.mxu0 0.0
  %1446 = vmatprep.subr.mxu0 0.0
  %1447 = vmatpush2.msra.mxu0 0.0
  %1448 = vmatprep.subr.mxu0 0.0
  %1449 = vmatpush2.msra.mxu0 0.0
  %1450 = vmatprep.subr.mxu0 0.0
  %1451 = vmatpush2.msra.mxu0 0.0
  %1452 = vmatprep.subr.mxu0 0.0
  %1453 = vmatpush2.msra.mxu0 0.0
  %1454 = vmatprep.subr.mxu0 0.0
  %1455 = vmatpush2.msra.mxu0 0.0
  %1456 = vmatprep.subr.mxu0 0.0
  %1457 = vmatpush2.msra.mxu0 0.0
  %1458 = vmatprep.subr.mxu0 0.0
  %1459 = vmatpush2.msra.mxu0 0.0
  %1460 = vmatprep.subr.mxu0 0.0
  %1461 = vmatpush2.msra.mxu0 0.0
  %1462 = vmatprep.mubr.f32.mxu0 0.0
  %1463 = vmatmul.mubr.f32.gmra.mxu0 %v1396
  %v1464 = vpop.f32.mrf.mxu0
  %v1465 = vadd.f32 %v1393, %v1464
  %v1466 = vpop.f32.mrf.mxu0
  %1467 = vdwg.mxu0
  %v1468 = vsel %vm154, %v1372, 0
  %1470 = vmatprep.subr.mxu0 0.0
  %1471 = vmatpush1.msra.mxu0 0.0
  %1472 = vmatprep.subr.mxu0 0.0
  %1473 = vmatpush1.msra.mxu0 0.0
  %1474 = vmatprep.subr.mxu0 0.0
  %1475 = vmatpush1.msra.mxu0 0.0
  %1476 = vmatprep.subr.mxu0 0.0
  %1477 = vmatpush1.msra.mxu0 0.0
  %1478 = vmatprep.subr.mxu0 0.0
  %1479 = vmatpush1.msra.mxu0 0.0
  %1480 = vmatprep.subr.mxu0 0.0
  %1481 = vmatpush1.msra.mxu0 0.0
  %1482 = vmatprep.subr.mxu0 0.0
  %1483 = vmatpush1.msra.mxu0 0.0
  %1484 = vmatprep.subr.mxu0 0.0
  %1485 = vmatpush1.msra.mxu0 0.0
  %1486 = vmatprep.subr.mxu0 0.0
  %1487 = vmatpush1.msra.mxu0 0.0
  %1488 = vmatprep.subr.mxu0 0.0
  %1489 = vmatpush1.msra.mxu0 0.0
  %1490 = vmatprep.subr.mxu0 0.0
  %1491 = vmatpush1.msra.mxu0 0.0
  %1492 = vmatprep.subr.mxu0 0.0
  %1493 = vmatpush1.msra.mxu0 0.0
  %1494 = vmatprep.subr.mxu0 0.0
  %1495 = vmatpush1.msra.mxu0 %v148
  %1496 = vmatprep.subr.mxu0 0.0
  %1497 = vmatpush1.msra.mxu0 %v147
  %1498 = vmatprep.subr.mxu0 0.0
  %1499 = vmatpush1.msra.mxu0 %v146
  %1500 = vmatprep.subr.mxu0 0.0
  %1501 = vmatpush1.msra.mxu0 %v145
  %1502 = vmatprep.subr.mxu0 0.0
  %1503 = vmatpush2.msra.mxu0 0.0
  %1504 = vmatprep.subr.mxu0 0.0
  %1505 = vmatpush2.msra.mxu0 0.0
  %1506 = vmatprep.subr.mxu0 0.0
  %1507 = vmatpush2.msra.mxu0 0.0
  %1508 = vmatprep.subr.mxu0 0.0
  %1509 = vmatpush2.msra.mxu0 0.0
  %1510 = vmatprep.subr.mxu0 0.0
  %1511 = vmatpush2.msra.mxu0 0.0
  %1512 = vmatprep.subr.mxu0 0.0
  %1513 = vmatpush2.msra.mxu0 0.0
  %1514 = vmatprep.subr.mxu0 0.0
  %1515 = vmatpush2.msra.mxu0 0.0
  %1516 = vmatprep.subr.mxu0 0.0
  %1517 = vmatpush2.msra.mxu0 0.0
  %1518 = vmatprep.subr.mxu0 0.0
  %1519 = vmatpush2.msra.mxu0 0.0
  %1520 = vmatprep.subr.mxu0 0.0
  %1521 = vmatpush2.msra.mxu0 0.0
  %1522 = vmatprep.subr.mxu0 0.0
  %1523 = vmatpush2.msra.mxu0 0.0
  %1524 = vmatprep.subr.mxu0 0.0
  %1525 = vmatpush2.msra.mxu0 0.0
  %1526 = vmatprep.subr.mxu0 0.0
  %1527 = vmatpush2.msra.mxu0 0.0
  %1528 = vmatprep.subr.mxu0 0.0
  %1529 = vmatpush2.msra.mxu0 0.0
  %1530 = vmatprep.subr.mxu0 0.0
  %1531 = vmatpush2.msra.mxu0 0.0
  %1532 = vmatprep.subr.mxu0 0.0
  %1533 = vmatpush2.msra.mxu0 0.0
  %1534 = vmatprep.mubr.f32.mxu0 0.0
  %1535 = vmatmul.mubr.f32.gmra.mxu0 %v1468
  %v1536 = vpop.f32.mrf.mxu0
  %v1537 = vadd.f32 0.0, %v1536
  %v1538 = vpop.f32.mrf.mxu0
  %1539 = vdwg.mxu0
  %v1541 = vrot.slane %v1537, 6
  %v1543 = vrot.slane %v1537, 4
  %v1545 = vrot.slane %v1537, 2
  %v1547 = vsel %vm50, %v1537, %v1541
  %v1548 = vsel %vm704, %v1547, %v1543
  %v1549 = vsel %vm706, %v1548, %v1545
  %v1550 = vadd.f32 %v707, %v1549
  %v1551 = vadd.f32 %v710, %v1549
  %v1553 = vsel %vm154, %v1550, 0
  %v1556 = vsel %vm154, %v1551, 0
  %1558 = vmatprep.subr.mxu0 0.0
  %1559 = vmatpush1.msra.mxu0 0.0
  %1560 = vmatprep.subr.mxu0 0.0
  %1561 = vmatpush1.msra.mxu0 0.0
  %1562 = vmatprep.subr.mxu0 0.0
  %1563 = vmatpush1.msra.mxu0 0.0
  %1564 = vmatprep.subr.mxu0 0.0
  %1565 = vmatpush1.msra.mxu0 0.0
  %1566 = vmatprep.subr.mxu0 0.0
  %1567 = vmatpush1.msra.mxu0 0.0
  %1568 = vmatprep.subr.mxu0 0.0
  %1569 = vmatpush1.msra.mxu0 0.0
  %1570 = vmatprep.subr.mxu0 0.0
  %1571 = vmatpush1.msra.mxu0 0.0
  %1572 = vmatprep.subr.mxu0 0.0
  %1573 = vmatpush1.msra.mxu0 0.0
  %1574 = vmatprep.subr.mxu0 0.0
  %1575 = vmatpush1.msra.mxu0 0.0
  %1576 = vmatprep.subr.mxu0 0.0
  %1577 = vmatpush1.msra.mxu0 0.0
  %1578 = vmatprep.subr.mxu0 0.0
  %1579 = vmatpush1.msra.mxu0 0.0
  %1580 = vmatprep.subr.mxu0 0.0
  %1581 = vmatpush1.msra.mxu0 0.0
  %1582 = vmatprep.subr.mxu0 0.0
  %1583 = vmatpush1.msra.mxu0 %v152
  %1584 = vmatprep.subr.mxu0 0.0
  %1585 = vmatpush1.msra.mxu0 %v151
  %1586 = vmatprep.subr.mxu0 0.0
  %1587 = vmatpush1.msra.mxu0 %v150
  %1588 = vmatprep.subr.mxu0 0.0
  %1589 = vmatpush1.msra.mxu0 %v149
  %1590 = vmatprep.subr.mxu0 0.0
  %1591 = vmatpush2.msra.mxu0 0.0
  %1592 = vmatprep.subr.mxu0 0.0
  %1593 = vmatpush2.msra.mxu0 0.0
  %1594 = vmatprep.subr.mxu0 0.0
  %1595 = vmatpush2.msra.mxu0 0.0
  %1596 = vmatprep.subr.mxu0 0.0
  %1597 = vmatpush2.msra.mxu0 0.0
  %1598 = vmatprep.subr.mxu0 0.0
  %1599 = vmatpush2.msra.mxu0 0.0
  %1600 = vmatprep.subr.mxu0 0.0
  %1601 = vmatpush2.msra.mxu0 0.0
  %1602 = vmatprep.subr.mxu0 0.0
  %1603 = vmatpush2.msra.mxu0 0.0
  %1604 = vmatprep.subr.mxu0 0.0
  %1605 = vmatpush2.msra.mxu0 0.0
  %1606 = vmatprep.subr.mxu0 0.0
  %1607 = vmatpush2.msra.mxu0 0.0
  %1608 = vmatprep.subr.mxu0 0.0
  %1609 = vmatpush2.msra.mxu0 0.0
  %1610 = vmatprep.subr.mxu0 0.0
  %1611 = vmatpush2.msra.mxu0 0.0
  %1612 = vmatprep.subr.mxu0 0.0
  %1613 = vmatpush2.msra.mxu0 0.0
  %1614 = vmatprep.subr.mxu0 0.0
  %1615 = vmatpush2.msra.mxu0 0.0
  %1616 = vmatprep.subr.mxu0 0.0
  %1617 = vmatpush2.msra.mxu0 0.0
  %1618 = vmatprep.subr.mxu0 0.0
  %1619 = vmatpush2.msra.mxu0 0.0
  %1620 = vmatprep.subr.mxu0 0.0
  %1621 = vmatpush2.msra.mxu0 0.0
  %1622 = vmatprep.mubr.f32.mxu0 0.0
  %1623 = vmatmul.mubr.f32.gmra.mxu0 %v1553
  %v1624 = vpop.f32.mrf.mxu0
  %v1625 = vadd.f32 0.0, %v1624
  %v1626 = vpop.f32.mrf.mxu0
  %1627 = vmatprep.mubr.f32.mxu0 0.0
  %1628 = vmatmul.mubr.f32.gmra.mxu0 %v1556
  %v1629 = vpop.f32.mrf.mxu0
  %v1630 = vadd.f32 0.0, %v1629
  %v1631 = vpop.f32.mrf.mxu0
  %1632 = vdwg.mxu0
  %v1634 = vsel %vm154, %v1625, 0
  %v1637 = vsel %vm154, %v1630, 0
  %1639 = vmatprep.subr.mxu0 0.0
  %1640 = vmatpush1.xpose.msra.mxu0 0.0
  %1641 = vmatprep.subr.mxu0 0.0
  %1642 = vmatpush1.xpose.msra.mxu0 0.0
  %1643 = vmatprep.subr.mxu0 0.0
  %1644 = vmatpush1.xpose.msra.mxu0 0.0
  %1645 = vmatprep.subr.mxu0 0.0
  %1646 = vmatpush1.xpose.msra.mxu0 0.0
  %1647 = vmatprep.subr.mxu0 0.0
  %1648 = vmatpush1.xpose.msra.mxu0 0.0
  %1649 = vmatprep.subr.mxu0 0.0
  %1650 = vmatpush1.xpose.msra.mxu0 0.0
  %1651 = vmatprep.subr.mxu0 0.0
  %1652 = vmatpush1.xpose.msra.mxu0 0.0
  %1653 = vmatprep.subr.mxu0 0.0
  %1654 = vmatpush1.xpose.msra.mxu0 0.0
  %1655 = vmatprep.subr.mxu0 0.0
  %1656 = vmatpush1.xpose.msra.mxu0 0.0
  %1657 = vmatprep.subr.mxu0 0.0
  %1658 = vmatpush1.xpose.msra.mxu0 0.0
  %1659 = vmatprep.subr.mxu0 0.0
  %1660 = vmatpush1.xpose.msra.mxu0 0.0
  %1661 = vmatprep.subr.mxu0 0.0
  %1662 = vmatpush1.xpose.msra.mxu0 0.0
  %1663 = vmatprep.subr.mxu0 0.0
  %1664 = vmatpush1.xpose.msra.mxu0 0.0
  %1665 = vmatprep.subr.mxu0 0.0
  %1666 = vmatpush1.xpose.msra.mxu0 0.0
  %1667 = vmatprep.subr.mxu0 0.0
  %1668 = vmatpush1.xpose.msra.mxu0 %v816
  %1669 = vmatprep.subr.mxu0 0.0
  %1670 = vmatpush1.xpose.msra.mxu0 %v813
  %1671 = vmatprep.subr.mxu0 0.0
  %1672 = vmatpush2.xpose.msra.mxu0 0.0
  %1673 = vmatprep.subr.mxu0 0.0
  %1674 = vmatpush2.xpose.msra.mxu0 0.0
  %1675 = vmatprep.subr.mxu0 0.0
  %1676 = vmatpush2.xpose.msra.mxu0 0.0
  %1677 = vmatprep.subr.mxu0 0.0
  %1678 = vmatpush2.xpose.msra.mxu0 0.0
  %1679 = vmatprep.subr.mxu0 0.0
  %1680 = vmatpush2.xpose.msra.mxu0 0.0
  %1681 = vmatprep.subr.mxu0 0.0
  %1682 = vmatpush2.xpose.msra.mxu0 0.0
  %1683 = vmatprep.subr.mxu0 0.0
  %1684 = vmatpush2.xpose.msra.mxu0 0.0
  %1685 = vmatprep.subr.mxu0 0.0
  %1686 = vmatpush2.xpose.msra.mxu0 0.0
  %1687 = vmatprep.subr.mxu0 0.0
  %1688 = vmatpush2.xpose.msra.mxu0 0.0
  %1689 = vmatprep.subr.mxu0 0.0
  %1690 = vmatpush2.xpose.msra.mxu0 0.0
  %1691 = vmatprep.subr.mxu0 0.0
  %1692 = vmatpush2.xpose.msra.mxu0 0.0
  %1693 = vmatprep.subr.mxu0 0.0
  %1694 = vmatpush2.xpose.msra.mxu0 0.0
  %1695 = vmatprep.subr.mxu0 0.0
  %1696 = vmatpush2.xpose.msra.mxu0 0.0
  %1697 = vmatprep.subr.mxu0 0.0
  %1698 = vmatpush2.xpose.msra.mxu0 0.0
  %1699 = vmatprep.subr.mxu0 0.0
  %1700 = vmatpush2.xpose.msra.mxu0 0.0
  %1701 = vmatprep.subr.mxu0 0.0
  %1702 = vmatpush2.xpose.msra.mxu0 0.0
  %1703 = vmatprep.mubr.f32.mxu0 0.0
  %1704 = vmatmul.mubr.f32.gmra.mxu0 %v1634
  %v1705 = vpop.f32.mrf.mxu0
  %v1706 = vadd.f32 %v733, %v1705
  %v1707 = vpop.f32.mrf.mxu0
  %1708 = vmatprep.mubr.f32.mxu0 0.0
  %1709 = vmatmul.mubr.f32.gmra.mxu0 %v1637
  %v1710 = vpop.f32.mrf.mxu0
  %v1711 = vadd.f32 %v734, %v1710
  %v1712 = vpop.f32.mrf.mxu0
  %1713 = vdwg.mxu0
  %v1714 = vsel %vm900, %v1706, -inf
  %1715 = vmax.xlane.f32.xlu0 %v1714
  %v1716 = vpop.xlane.xlu0 %1715
  %v1717 = vsel %vm900, %v1711, -inf
  %1718 = vmax.xlane.f32.xlu0 %v1717
  %v1719 = vpop.xlane.xlu0 %1718
  %v1720 = vsub.f32 %v1706, %v1716
  %v1721 = vsub.f32 %v1711, %v1719
  %v1722 = vmul.f32 %v1720, 1.442695
  %v1723 = vpow.pop %v1722
  %v1724 = vmul.f32 %v1721, 1.442695
  %v1725 = vpow.pop %v1724
  %v1726 = vsel %vm900, %v1723, 0.0
  %1727 = vadd.xlane.f32.xlu0 %v1726
  %v1728 = vpop.xlane.xlu0 %1727
  %v1729 = vsel %vm900, %v1725, 0.0
  %1730 = vadd.xlane.f32.xlu0 %v1729
  %v1731 = vpop.xlane.xlu0 %1730
  %v1732 = vrcp.pop %v1728
  %v1733 = vrcp.pop %v1731
  %v1734 = vmul.f32 %v1723, %v1732
  %v1735 = vmul.f32 %v1725, %v1733
  %v1737 = vsel %vm900, %v1734, 0
  %v1740 = vsel %vm900, %v1735, 0
  %1742 = vmatprep.subr.mxu0 0.0
  %1743 = vmatpush1.msra.mxu0 0.0
  %1744 = vmatprep.subr.mxu0 0.0
  %1745 = vmatpush1.msra.mxu0 0.0
  %1746 = vmatprep.subr.mxu0 0.0
  %1747 = vmatpush1.msra.mxu0 0.0
  %1748 = vmatprep.subr.mxu0 0.0
  %1749 = vmatpush1.msra.mxu0 0.0
  %1750 = vmatprep.subr.mxu0 0.0
  %1751 = vmatpush1.msra.mxu0 0.0
  %1752 = vmatprep.subr.mxu0 0.0
  %1753 = vmatpush1.msra.mxu0 0.0
  %1754 = vmatprep.subr.mxu0 0.0
  %1755 = vmatpush1.msra.mxu0 0.0
  %1756 = vmatprep.subr.mxu0 0.0
  %1757 = vmatpush1.msra.mxu0 0.0
  %1758 = vmatprep.subr.mxu0 0.0
  %1759 = vmatpush1.msra.mxu0 0.0
  %1760 = vmatprep.subr.mxu0 0.0
  %1761 = vmatpush1.msra.mxu0 0.0
  %1762 = vmatprep.subr.mxu0 0.0
  %1763 = vmatpush1.msra.mxu0 0.0
  %1764 = vmatprep.subr.mxu0 0.0
  %1765 = vmatpush1.msra.mxu0 0.0
  %1766 = vmatprep.subr.mxu0 0.0
  %1767 = vmatpush1.msra.mxu0 0.0
  %1768 = vmatprep.subr.mxu0 0.0
  %1769 = vmatpush1.msra.mxu0 0.0
  %1770 = vmatprep.subr.mxu0 0.0
  %1771 = vmatpush1.msra.mxu0 %v710
  %1772 = vmatprep.subr.mxu0 0.0
  %1773 = vmatpush1.msra.mxu0 %v707
  %1774 = vmatprep.subr.mxu0 0.0
  %1775 = vmatpush2.msra.mxu0 0.0
  %1776 = vmatprep.subr.mxu0 0.0
  %1777 = vmatpush2.msra.mxu0 0.0
  %1778 = vmatprep.subr.mxu0 0.0
  %1779 = vmatpush2.msra.mxu0 0.0
  %1780 = vmatprep.subr.mxu0 0.0
  %1781 = vmatpush2.msra.mxu0 0.0
  %1782 = vmatprep.subr.mxu0 0.0
  %1783 = vmatpush2.msra.mxu0 0.0
  %1784 = vmatprep.subr.mxu0 0.0
  %1785 = vmatpush2.msra.mxu0 0.0
  %1786 = vmatprep.subr.mxu0 0.0
  %1787 = vmatpush2.msra.mxu0 0.0
  %1788 = vmatprep.subr.mxu0 0.0
  %1789 = vmatpush2.msra.mxu0 0.0
  %1790 = vmatprep.subr.mxu0 0.0
  %1791 = vmatpush2.msra.mxu0 0.0
  %1792 = vmatprep.subr.mxu0 0.0
  %1793 = vmatpush2.msra.mxu0 0.0
  %1794 = vmatprep.subr.mxu0 0.0
  %1795 = vmatpush2.msra.mxu0 0.0
  %1796 = vmatprep.subr.mxu0 0.0
  %1797 = vmatpush2.msra.mxu0 0.0
  %1798 = vmatprep.subr.mxu0 0.0
  %1799 = vmatpush2.msra.mxu0 0.0
  %1800 = vmatprep.subr.mxu0 0.0
  %1801 = vmatpush2.msra.mxu0 0.0
  %1802 = vmatprep.subr.mxu0 0.0
  %1803 = vmatpush2.msra.mxu0 0.0
  %1804 = vmatprep.subr.mxu0 0.0
  %1805 = vmatpush2.msra.mxu0 0.0
  %1806 = vmatprep.mubr.f32.mxu0 0.0
  %1807 = vmatmul.mubr.f32.gmra.mxu0 %v1737
  %v1808 = vpop.f32.mrf.mxu0
  %v1809 = vadd.f32 0.0, %v1808
  %v1810 = vpop.f32.mrf.mxu0
  %1811 = vmatprep.mubr.f32.mxu0 0.0
  %1812 = vmatmul.mubr.f32.gmra.mxu0 %v1740
  %v1813 = vpop.f32.mrf.mxu0
  %v1814 = vadd.f32 0.0, %v1813
  %v1815 = vpop.f32.mrf.mxu0
  %1816 = vdwg.mxu0
  %1819 = vrot.lane.b32.xlu0 %v1809, 32
  %v1820 = vpop.permute.xlu0 %1819
  %1821 = vrot.lane.b32.xlu0 %v1814, 32
  %v1822 = vpop.permute.xlu0 %1821
  %v1825 = vsel %vm154, %v707, %v1820
  %v1826 = vsel %vm154, %v710, %v1822
  %v1827 = vld [vmem:[%s3 + $0x80] sm:$0xff]
  %v1828 = vld [vmem:[%s3 + $0x88] sm:$0xff]
  %v1829 = vld [vmem:[%s3 + $0x90] sm:$0xff]
  %v1830 = vld [vmem:[%s3 + $0x98] sm:$0xff]
  %v1831 = vld [vmem:[%s3 + $0xa0] sm:$0xff]
  %v1832 = vld [vmem:[%s3 + $0xa8] sm:$0xff]
  %v1833 = vld [vmem:[%s3 + $0xb0] sm:$0xff]
  %v1834 = vld [vmem:[%s3 + $0xb8] sm:$0xff]
  %v1835 = vld [vmem:[%s4 + $0x2] sm:$0x1]
  %v1836 = vlaneseq
  %v1837 = vshrl.u32 %v1836, 7
  %v1838 = vsub.s32 0, %v1837
  %v1839 = vrot.slane %v1835, %v1838
  %v1841 = vsel %vm995, %v1825, 0
  %v1844 = vsel %vm995, %v1826, 0
  %1846 = vmatprep.subr.mxu0 0.0
  %1847 = vmatpush1.msra.mxu0 0.0
  %1848 = vmatprep.subr.mxu0 0.0
  %1849 = vmatpush1.msra.mxu0 0.0
  %1850 = vmatprep.subr.mxu0 0.0
  %1851 = vmatpush1.msra.mxu0 0.0
  %1852 = vmatprep.subr.mxu0 0.0
  %1853 = vmatpush1.msra.mxu0 0.0
  %1854 = vmatprep.subr.mxu0 0.0
  %1855 = vmatpush1.msra.mxu0 0.0
  %1856 = vmatprep.subr.mxu0 0.0
  %1857 = vmatpush1.msra.mxu0 0.0
  %1858 = vmatprep.subr.mxu0 0.0
  %1859 = vmatpush1.msra.mxu0 0.0
  %1860 = vmatprep.subr.mxu0 0.0
  %1861 = vmatpush1.msra.mxu0 0.0
  %1862 = vmatprep.subr.mxu0 0.0
  %1863 = vmatpush1.msra.mxu0 %v1834
  %1864 = vmatprep.subr.mxu0 0.0
  %1865 = vmatpush1.msra.mxu0 %v1833
  %1866 = vmatprep.subr.mxu0 0.0
  %1867 = vmatpush1.msra.mxu0 %v1832
  %1868 = vmatprep.subr.mxu0 0.0
  %1869 = vmatpush1.msra.mxu0 %v1831
  %1870 = vmatprep.subr.mxu0 0.0
  %1871 = vmatpush1.msra.mxu0 %v1830
  %1872 = vmatprep.subr.mxu0 0.0
  %1873 = vmatpush1.msra.mxu0 %v1829
  %1874 = vmatprep.subr.mxu0 0.0
  %1875 = vmatpush1.msra.mxu0 %v1828
  %1876 = vmatprep.subr.mxu0 0.0
  %1877 = vmatpush1.msra.mxu0 %v1827
  %1878 = vmatprep.subr.mxu0 0.0
  %1879 = vmatpush2.msra.mxu0 0.0
  %1880 = vmatprep.subr.mxu0 0.0
  %1881 = vmatpush2.msra.mxu0 0.0
  %1882 = vmatprep.subr.mxu0 0.0
  %1883 = vmatpush2.msra.mxu0 0.0
  %1884 = vmatprep.subr.mxu0 0.0
  %1885 = vmatpush2.msra.mxu0 0.0
  %1886 = vmatprep.subr.mxu0 0.0
  %1887 = vmatpush2.msra.mxu0 0.0
  %1888 = vmatprep.subr.mxu0 0.0
  %1889 = vmatpush2.msra.mxu0 0.0
  %1890 = vmatprep.subr.mxu0 0.0
  %1891 = vmatpush2.msra.mxu0 0.0
  %1892 = vmatprep.subr.mxu0 0.0
  %1893 = vmatpush2.msra.mxu0 0.0
  %1894 = vmatprep.subr.mxu0 0.0
  %1895 = vmatpush2.msra.mxu0 0.0
  %1896 = vmatprep.subr.mxu0 0.0
  %1897 = vmatpush2.msra.mxu0 0.0
  %1898 = vmatprep.subr.mxu0 0.0
  %1899 = vmatpush2.msra.mxu0 0.0
  %1900 = vmatprep.subr.mxu0 0.0
  %1901 = vmatpush2.msra.mxu0 0.0
  %1902 = vmatprep.subr.mxu0 0.0
  %1903 = vmatpush2.msra.mxu0 0.0
  %1904 = vmatprep.subr.mxu0 0.0
  %1905 = vmatpush2.msra.mxu0 0.0
  %1906 = vmatprep.subr.mxu0 0.0
  %1907 = vmatpush2.msra.mxu0 0.0
  %1908 = vmatprep.subr.mxu0 0.0
  %1909 = vmatpush2.msra.mxu0 0.0
  %1910 = vmatprep.mubr.f32.mxu0 0.0
  %1911 = vmatmul.mubr.f32.gmra.mxu0 %v1841
  %v1912 = vpop.f32.mrf.mxu0
  %v1913 = vadd.f32 %v1839, %v1912
  %v1914 = vpop.f32.mrf.mxu0
  %1915 = vmatprep.mubr.f32.mxu0 0.0
  %1916 = vmatmul.mubr.f32.gmra.mxu0 %v1844
  %v1917 = vpop.f32.mrf.mxu0
  %v1918 = vadd.f32 %v1839, %v1917
  %v1919 = vpop.f32.mrf.mxu0
  %1920 = vdwg.mxu0
  %1921 = vst [vmem:[%s5] sm:$0xff] %v1913
  %1922 = vst [vmem:[%s5 + $0x8] sm:$0xff] %v1918
  %1923 = vst [vmem:[%s5 + $0x10] sm:$0x3] %v1065
  %1924 = vst [vmem:[%s5 + $0x12] sm:$0x3] %v1465
  // Predicated region
  $region22: #{seq2seq_forward.1} parent=0 // pred_check
    _
  $region23: #{seq2seq_forward.1} parent=0 // pred_check_branch
    %1926 = sbr.rel (0) target = $region25
  $region24: #{seq2seq_forward.1} parent=0 // pred_region
    _
  $region25: #{seq2seq_forward.1} parent=0 // pred_fallthru
    _
  // Predicated region
  $region26: #{seq2seq_forward.1} parent=0 // pred_check
    _
  $region27: #{seq2seq_forward.1} parent=0 // pred_check_branch
    %1928 = sbr.rel (0) target = $region29
  $region28: #{seq2seq_forward.1} parent=0 // pred_region
    _
  $region29: #{seq2seq_forward.1} parent=0 // pred_fallthru
    _

</llo_original>
